<compile_context>
chip_gen: v7x
topology: tpu7x:2x2x1
jax: 0.10.0
libtpu: 0.0.40
codegen_flags: <defaults>
</compile_context>

<pallas_src>
import jax
import jax.numpy as jnp
from jax import lax
from jax.experimental import pallas as pl
from jax.experimental.pallas import tpu as pltpu


# ---------------------------------------------------------------------------
# Fused kernel factory. Kernel args:
#   p_ref : (9*Cin+1, Bblk*HW)  im2col patches, last row = ones (conv bias)
#   w_ref : (F+QKVp, 9*Cin+1)   packed weight slab (see wrapper)
#   o_ref : (Bblk, F, HW)       NCHW feature map == flatten() layout
# ---------------------------------------------------------------------------
def _make_fused_kernel(Cin, F, Dk, HW, Bblk, T):
    K9p = 9 * Cin + 1                     # im2col rows + ones row
    sec = -(-Dk // 8) * 8                 # sublane-aligned q / k sections
    QKVp = 2 * sec + F + 1                # q | k | gamma*v | ones row
    n_t = HW // T

    def kernel(p_ref, w_ref, o_ref):
        w = w_ref[...]                                        # (F+QKVp, K9p) f32
        wc = w[0:F, :]                                        # conv w (+bias col)
        wqkv = w[F:F + QKVp, 0:F]                             # fused 1x1 proj w
        bqkv = w[F:F + QKVp, F:F + 1]                         # fused proj bias

        patches = p_ref[...].astype(jnp.float32)              # (K9p, Bblk*HW)

        # --- features: 3x3 conv as one wide im2col matmul (bias folded) + ReLU
        f = jnp.maximum(
            jnp.dot(wc, patches, preferred_element_type=jnp.float32), 0.0)

        # --- fused q/k/v 1x1 projections: one matmul over the whole batch.
        #     Row (2*sec + F) has zero weight and bias 1.0 -> an exact ones row
        #     that rides the value matmul to yield the softmax denominator.
        qkv = jnp.dot(wqkv, f, preferred_element_type=jnp.float32) + bqkv
        q = qkv[0:Dk, :]                                       # (Dk, N)
        k = qkv[sec:sec + Dk, :]                                # (Dk, N)
        va = qkv[2 * sec:2 * sec + F + 1, :]                    # (F+1, N) = g*v | 1

        for b in range(Bblk):                                   # per-image attn
            s = b * HW
            kb = k[:, s:s + HW].astype(jnp.bfloat16)            # (Dk, HW)
            vb = va[:, s:s + HW].astype(jnp.bfloat16)           # (F+1, HW)
            for t in range(n_t):                                # query-row tiles
                c0 = s + t * T
                qt = q[:, c0:c0 + T].astype(jnp.bfloat16)       # (Dk, T)
                # energy[i, j] = <q_i, k_j>    (T, HW), f32 accumulation
                energy = lax.dot_general(qt, kb, (((0,), (0,)), ((), ())),
                                         preferred_element_type=jnp.float32)
                m = jnp.max(energy, axis=-1, keepdims=True)     # f32 softmax
                e = jnp.exp(energy - m).astype(jnp.bfloat16)    # (T, HW) unnorm p
                # rows 0..F-1: unnormalized gamma*out ; row F: softmax denom
                oa = lax.dot_general(vb, e, (((1,), (1,)), ((), ())),
                                     preferred_element_type=jnp.float32)  # (F+1,T)
                inv = 1.0 / oa[F:F + 1, :]                      # exact recip (1,T)
                yt = oa[0:F, :] * inv + f[:, c0:c0 + T]         # normalize + resid
                o_ref[b, :, t * T:(t + 1) * T] = yt.astype(o_ref.dtype)

    return kernel


# ---------------------------------------------------------------------------
# Wrapper: build im2col patches + one packed weight slab, call the fused kernel.
# ---------------------------------------------------------------------------
def attn_forward(x_nchw, params, *, num_blocks=1):
    """ATTN forward. num_blocks=1 (default): whole batch in one grid step
    (minimizes per-step overhead on v5e/v6e). On v7x, num_blocks=2 splits the
    batch across both TensorCores."""
    B, Cin, H, W = x_nchw.shape
    Fc = params["conv_w"].shape[0]          # conv_w is OIHW (PyTorch layout)
    Dk = params["wq"].shape[0]
    HW = H * W
    K9 = 9 * Cin
    sec = -(-Dk // 8) * 8
    QKVp = 2 * sec + Fc + 1
    assert B % num_blocks == 0
    Bblk = B // num_blocks
    T = min(128, HW)
    assert HW % T == 0 and HW % 128 == 0
    dt = jnp.float32

    # im2col: rows = (tap, channel), cols = (batch, h, w); ones row folds bias.
    xp = jnp.pad(x_nchw, ((0, 0), (0, 0), (1, 1), (1, 1)))        # padding=1
    taps = [xp[:, :, dh:dh + H, dw:dw + W]
            for dh in range(3) for dw in range(3)]                # 9 x (B,C,H,W)
    patches = jnp.stack(taps, axis=0)                             # (9,B,C,H,W)
    patches = jnp.transpose(patches, (0, 2, 1, 3, 4)).reshape(K9, B * HW)
    patches = jnp.concatenate(
        [patches, jnp.ones((1, B * HW), patches.dtype)], axis=0)  # (K9+1, B*HW)

    # Packed weight slab (single lane-dense constant input):
    #   rows [0:F)        : im2col conv weight | conv bias column
    #   rows [F:F+QKVp)   : [wq|0 ; wk|0 ; gamma*wv ; 0] with bias col
    #                       [bq|0 ; bk|0 ; gamma*bv ; 1]     (gamma folded in)
    gamma = params["gamma"][0]
    wc = jnp.transpose(params["conv_w"], (0, 2, 3, 1)).reshape(Fc, K9)
    wc_aug = jnp.concatenate([wc, params["conv_b"].reshape(Fc, 1)], axis=1)
    zpw = jnp.zeros((sec - Dk, Fc), dt)
    zpb = jnp.zeros((sec - Dk,), dt)
    wqkv = jnp.concatenate([params["wq"], zpw,
                            params["wk"], zpw,
                            gamma * params["wv"],
                            jnp.zeros((1, Fc), dt)], axis=0)      # (QKVp, Fc)
    bqkv = jnp.concatenate([params["bq"], zpb,
                            params["bk"], zpb,
                            gamma * params["bv"],
                            jnp.ones((1,), dt)]).reshape(QKVp, 1)
    bot = jnp.concatenate(
        [wqkv, bqkv, jnp.zeros((QKVp, K9 + 1 - (Fc + 1)), dt)], axis=1)
    wslab = jnp.concatenate([wc_aug, bot], axis=0).astype(dt)     # (F+QKVp, K9+1)

    kernel = _make_fused_kernel(Cin, Fc, Dk, HW, Bblk, T)
    y = pl.pallas_call(
        kernel,
        out_shape=jax.ShapeDtypeStruct((B, Fc, HW), x_nchw.dtype),
        grid=(num_blocks,),
        in_specs=[
            pl.BlockSpec((K9 + 1, Bblk * HW), lambda i: (0, i)),   # patches
            pl.BlockSpec((Fc + QKVp, K9 + 1), lambda i: (0, 0)),   # weight slab
        ],
        out_specs=pl.BlockSpec((Bblk, Fc, HW), lambda i: (i, 0, 0)),
        compiler_params=pltpu.CompilerParams(
            dimension_semantics=("parallel",)),                    # v7x: 2 TCs
    )(patches.astype(dt), wslab)

    # nn.Flatten() on NCHW: (B, C, HW) -> (B, C*H*W); contiguous merge (free).
    return y.reshape(B, Fc * HW)


# ---------------------------------------------------------------------------
# Pure-JAX reference (high precision) for the self-check.
# ---------------------------------------------------------------------------
def _attn_reference(x, params):
    hp = lax.Precision.HIGHEST
    f = lax.conv_general_dilated(x, params["conv_w"], (1, 1), "SAME",
                                 dimension_numbers=("NCHW", "OIHW", "NCHW"),
                                 precision=hp)
    f = jax.nn.relu(f + params["conv_b"][None, :, None, None])
    B, Fc, H, W = f.shape
    ff = f.reshape(B, Fc, H * W)
    q = jnp.einsum("df,bfn->bdn", params["wq"], ff, precision=hp) + \
        params["bq"][None, :, None]
    k = jnp.einsum("df,bfn->bdn", params["wk"], ff, precision=hp) + \
        params["bk"][None, :, None]
    v = jnp.einsum("cf,bfn->bcn", params["wv"], ff, precision=hp) + \
        params["bv"][None, :, None]
    energy = jnp.einsum("bdi,bdj->bij", q, k, precision=hp)
    attn = jax.nn.softmax(energy, axis=-1)
    out = jnp.einsum("bcj,bij->bci", v, attn, precision=hp)
    y = params["gamma"][0] * out + ff
    return y.reshape(B, Fc * H * W)


if __name__ == "__main__":
    key = jax.random.PRNGKey(0)
    ks = jax.random.split(key, 9)

    B, Cin, H, W = 2, 4, 16, 16
    Fc, Dk = 8, 4

    x = jax.random.normal(ks[0], (B, Cin, H, W), jnp.float32)
    params = dict(
        conv_w=jax.random.normal(ks[1], (Fc, Cin, 3, 3), jnp.float32) * 0.1,  # OIHW
        conv_b=jax.random.normal(ks[2], (Fc,), jnp.float32) * 0.1,
        wq=jax.random.normal(ks[3], (Dk, Fc), jnp.float32) * 0.1,
        bq=jax.random.normal(ks[4], (Dk,), jnp.float32) * 0.1,
        wk=jax.random.normal(ks[5], (Dk, Fc), jnp.float32) * 0.1,
        bk=jax.random.normal(ks[6], (Dk,), jnp.float32) * 0.1,
        wv=jax.random.normal(ks[7], (Fc, Fc), jnp.float32) * 0.1,
        bv=jax.random.normal(ks[8], (Fc,), jnp.float32) * 0.1,
        gamma=jnp.array([0.5], jnp.float32),
    )

    out = jax.jit(attn_forward)(x, params)
    jax.block_until_ready(out)

    assert out.shape == (B, Fc * H * W), out.shape
    assert jnp.isfinite(out).all()
    ref = _attn_reference(x, params)
    # exact softmax reciprocal; residual error is only the bf16 MXU operands
    assert jnp.allclose(out, ref, rtol=5e-3, atol=5e-3), float(
        jnp.max(jnp.abs(out - ref)))
    print("KERNEL_OK")
</pallas_src>

<mosaic_0001>
module attributes {stable_mosaic.version = 11 : i64} {
  func.func @kernel(%arg0: i32, %arg1: memref<37x512xf32, #tpu.memory_space<vmem>>, %arg2: memref<33x37xf32, #tpu.memory_space<vmem>>, %arg3: memref<2x8x256xf32, #tpu.memory_space<vmem>>) attributes {dimension_semantics = [#tpu.dimension_semantics<parallel>], iteration_bounds = array<i64: 1>, scalar_prefetch = 0 : i64, scratch_operands = 0 : i64, tpu.core_type = #tpu.core_type<tc>, window_params = [{transform_indices = @transform_0, window_bounds = array<i64: 37, 512>}, {pipeline_mode = #tpu.pipeline_mode<synchronous>, transform_indices = @transform_1, window_bounds = array<i64: 33, 37>}, {transform_indices = @transform_2, window_bounds = array<i64: 2, 8, 256>}]} {
    %c0 = arith.constant 0 : index
    %c0_0 = arith.constant 0 : index
    %0 = vector.load %arg2[%c0, %c0_0] : memref<33x37xf32, #tpu.memory_space<vmem>>, vector<33x37xf32>
    %1 = vector.extract_strided_slice %0 {offsets = [0, 0], sizes = [8, 37], strides = [1, 1]} : vector<33x37xf32> to vector<8x37xf32>
    %2 = vector.extract_strided_slice %0 {offsets = [8, 0], sizes = [25, 8], strides = [1, 1]} : vector<33x37xf32> to vector<25x8xf32>
    %3 = vector.extract_strided_slice %0 {offsets = [8, 8], sizes = [25, 1], strides = [1, 1]} : vector<33x37xf32> to vector<25x1xf32>
    %c0_1 = arith.constant 0 : index
    %c0_2 = arith.constant 0 : index
    %4 = vector.load %arg1[%c0_1, %c0_2] : memref<37x512xf32, #tpu.memory_space<vmem>>, vector<37x512xf32>
    %cst = arith.constant dense<0.000000e+00> : vector<8x512xf32>
    %5 = tpu.matmul %1, %4, %cst {dimension_numbers = #tpu.dot_dimension_numbers<[1], [0], [0], [1], [0, 0, 1, 1], [], []>} : vector<8x37xf32>, vector<37x512xf32>, vector<8x512xf32> -> vector<8x512xf32>
    %cst_3 = arith.constant 0.000000e+00 : f32
    %6 = vector.broadcast %cst_3 : f32 to vector<8x512xf32>
    %7 = arith.maximumf %5, %6 : vector<8x512xf32>
    %cst_4 = arith.constant dense<0.000000e+00> : vector<25x512xf32>
    %8 = tpu.matmul %2, %7, %cst_4 {dimension_numbers = #tpu.dot_dimension_numbers<[1], [0], [0], [1], [0, 0, 1, 1], [], []>} : vector<25x8xf32>, vector<8x512xf32>, vector<25x512xf32> -> vector<25x512xf32>
    %9 = vector.broadcast %3 : vector<25x1xf32> to vector<25x512xf32>
    %10 = arith.addf %8, %9 : vector<25x512xf32>
    %11 = vector.extract_strided_slice %10 {offsets = [0, 0], sizes = [4, 512], strides = [1, 1]} : vector<25x512xf32> to vector<4x512xf32>
    %12 = vector.extract_strided_slice %10 {offsets = [8, 0], sizes = [4, 512], strides = [1, 1]} : vector<25x512xf32> to vector<4x512xf32>
    %13 = vector.extract_strided_slice %10 {offsets = [16, 0], sizes = [9, 512], strides = [1, 1]} : vector<25x512xf32> to vector<9x512xf32>
    %14 = vector.extract_strided_slice %12 {offsets = [0, 0], sizes = [4, 256], strides = [1, 1]} : vector<4x512xf32> to vector<4x256xf32>
    %15 = arith.truncf %14 : vector<4x256xf32> to vector<4x256xbf16>
    %16 = vector.extract_strided_slice %13 {offsets = [0, 0], sizes = [9, 256], strides = [1, 1]} : vector<9x512xf32> to vector<9x256xf32>
    %17 = arith.truncf %16 : vector<9x256xf32> to vector<9x256xbf16>
    %18 = vector.extract_strided_slice %11 {offsets = [0, 0], sizes = [4, 128], strides = [1, 1]} : vector<4x512xf32> to vector<4x128xf32>
    %19 = arith.truncf %18 : vector<4x128xf32> to vector<4x128xbf16>
    %cst_5 = arith.constant dense<0.000000e+00> : vector<128x256xf32>
    %20 = tpu.matmul %19, %15, %cst_5 {dimension_numbers = #tpu.dot_dimension_numbers<[0], [0], [1], [1], [0, 1, 1, 1], [], []>} : vector<4x128xbf16>, vector<4x256xbf16>, vector<128x256xf32> -> vector<128x256xf32>
    %cst_6 = arith.constant dense<0xFF800000> : vector<128xf32>
    %21 = vector.multi_reduction <maximumf>, %20, %cst_6 [1] : vector<128x256xf32> to vector<128xf32>
    %22 = vector.shape_cast %21 : vector<128xf32> to vector<128x1xf32>
    %23 = vector.broadcast %22 : vector<128x1xf32> to vector<128x256xf32>
    %24 = arith.subf %20, %23 : vector<128x256xf32>
    %25 = math.exp %24 : vector<128x256xf32>
    %26 = arith.truncf %25 : vector<128x256xf32> to vector<128x256xbf16>
    %cst_7 = arith.constant dense<0.000000e+00> : vector<9x128xf32>
    %27 = tpu.matmul %17, %26, %cst_7 {dimension_numbers = #tpu.dot_dimension_numbers<[1], [1], [0], [0], [0, 0, 1, 0], [], []>} : vector<9x256xbf16>, vector<128x256xbf16>, vector<9x128xf32> -> vector<9x128xf32>
    %28 = vector.extract_strided_slice %27 {offsets = [8, 0], sizes = [1, 128], strides = [1, 1]} : vector<9x128xf32> to vector<1x128xf32>
    %cst_8 = arith.constant 1.000000e+00 : f32
    %29 = vector.broadcast %cst_8 : f32 to vector<1x128xf32>
    %30 = arith.divf %29, %28 : vector<1x128xf32>
    %31 = vector.extract_strided_slice %27 {offsets = [0, 0], sizes = [8, 128], strides = [1, 1]} : vector<9x128xf32> to vector<8x128xf32>
    %32 = vector.broadcast %30 : vector<1x128xf32> to vector<8x128xf32>
    %33 = arith.mulf %31, %32 : vector<8x128xf32>
    %34 = vector.extract_strided_slice %7 {offsets = [0, 0], sizes = [8, 128], strides = [1, 1]} : vector<8x512xf32> to vector<8x128xf32>
    %35 = arith.addf %33, %34 : vector<8x128xf32>
    %c0_9 = arith.constant 0 : index
    %c0_10 = arith.constant 0 : index
    %c0_11 = arith.constant 0 : index
    %36 = vector.load %arg3[%c0_9, %c0_10, %c0_11] : memref<2x8x256xf32, #tpu.memory_space<vmem>>, vector<1x8x128xf32>
    %37 = vector.shape_cast %36 : vector<1x8x128xf32> to vector<8x128xf32>
    %38 = vector.shape_cast %35 : vector<8x128xf32> to vector<1x8x128xf32>
    tpu.vector_store %arg3[%c0_9, %c0_10, %c0_11], %38 {strides = array<i32>} : memref<2x8x256xf32, #tpu.memory_space<vmem>>, vector<1x8x128xf32>,
    %39 = vector.extract_strided_slice %11 {offsets = [0, 128], sizes = [4, 128], strides = [1, 1]} : vector<4x512xf32> to vector<4x128xf32>
    %40 = arith.truncf %39 : vector<4x128xf32> to vector<4x128xbf16>
    %cst_12 = arith.constant dense<0.000000e+00> : vector<128x256xf32>
    %41 = tpu.matmul %40, %15, %cst_12 {dimension_numbers = #tpu.dot_dimension_numbers<[0], [0], [1], [1], [0, 1, 1, 1], [], []>} : vector<4x128xbf16>, vector<4x256xbf16>, vector<128x256xf32> -> vector<128x256xf32>
    %cst_13 = arith.constant dense<0xFF800000> : vector<128xf32>
    %42 = vector.multi_reduction <maximumf>, %41, %cst_13 [1] : vector<128x256xf32> to vector<128xf32>
    %43 = vector.shape_cast %42 : vector<128xf32> to vector<128x1xf32>
    %44 = vector.broadcast %43 : vector<128x1xf32> to vector<128x256xf32>
    %45 = arith.subf %41, %44 : vector<128x256xf32>
    %46 = math.exp %45 : vector<128x256xf32>
    %47 = arith.truncf %46 : vector<128x256xf32> to vector<128x256xbf16>
    %cst_14 = arith.constant dense<0.000000e+00> : vector<9x128xf32>
    %48 = tpu.matmul %17, %47, %cst_14 {dimension_numbers = #tpu.dot_dimension_numbers<[1], [1], [0], [0], [0, 0, 1, 0], [], []>} : vector<9x256xbf16>, vector<128x256xbf16>, vector<9x128xf32> -> vector<9x128xf32>
    %49 = vector.extract_strided_slice %48 {offsets = [8, 0], sizes = [1, 128], strides = [1, 1]} : vector<9x128xf32> to vector<1x128xf32>
    %cst_15 = arith.constant 1.000000e+00 : f32
    %50 = vector.broadcast %cst_15 : f32 to vector<1x128xf32>
    %51 = arith.divf %50, %49 : vector<1x128xf32>
    %52 = vector.extract_strided_slice %48 {offsets = [0, 0], sizes = [8, 128], strides = [1, 1]} : vector<9x128xf32> to vector<8x128xf32>
    %53 = vector.broadcast %51 : vector<1x128xf32> to vector<8x128xf32>
    %54 = arith.mulf %52, %53 : vector<8x128xf32>
    %55 = vector.extract_strided_slice %7 {offsets = [0, 128], sizes = [8, 128], strides = [1, 1]} : vector<8x512xf32> to vector<8x128xf32>
    %56 = arith.addf %54, %55 : vector<8x128xf32>
    %c0_16 = arith.constant 0 : index
    %c0_17 = arith.constant 0 : index
    %c128 = arith.constant 128 : index
    %57 = vector.load %arg3[%c0_16, %c0_17, %c128] : memref<2x8x256xf32, #tpu.memory_space<vmem>>, vector<1x8x128xf32>
    %58 = vector.shape_cast %57 : vector<1x8x128xf32> to vector<8x128xf32>
    %59 = vector.shape_cast %56 : vector<8x128xf32> to vector<1x8x128xf32>
    tpu.vector_store %arg3[%c0_16, %c0_17, %c128], %59 {strides = array<i32>} : memref<2x8x256xf32, #tpu.memory_space<vmem>>, vector<1x8x128xf32>,
    %60 = vector.extract_strided_slice %12 {offsets = [0, 256], sizes = [4, 256], strides = [1, 1]} : vector<4x512xf32> to vector<4x256xf32>
    %61 = arith.truncf %60 : vector<4x256xf32> to vector<4x256xbf16>
    %62 = vector.extract_strided_slice %13 {offsets = [0, 256], sizes = [9, 256], strides = [1, 1]} : vector<9x512xf32> to vector<9x256xf32>
    %63 = arith.truncf %62 : vector<9x256xf32> to vector<9x256xbf16>
    %64 = vector.extract_strided_slice %11 {offsets = [0, 256], sizes = [4, 128], strides = [1, 1]} : vector<4x512xf32> to vector<4x128xf32>
    %65 = arith.truncf %64 : vector<4x128xf32> to vector<4x128xbf16>
    %cst_18 = arith.constant dense<0.000000e+00> : vector<128x256xf32>
    %66 = tpu.matmul %65, %61, %cst_18 {dimension_numbers = #tpu.dot_dimension_numbers<[0], [0], [1], [1], [0, 1, 1, 1], [], []>} : vector<4x128xbf16>, vector<4x256xbf16>, vector<128x256xf32> -> vector<128x256xf32>
    %cst_19 = arith.constant dense<0xFF800000> : vector<128xf32>
    %67 = vector.multi_reduction <maximumf>, %66, %cst_19 [1] : vector<128x256xf32> to vector<128xf32>
    %68 = vector.shape_cast %67 : vector<128xf32> to vector<128x1xf32>
    %69 = vector.broadcast %68 : vector<128x1xf32> to vector<128x256xf32>
    %70 = arith.subf %66, %69 : vector<128x256xf32>
    %71 = math.exp %70 : vector<128x256xf32>
    %72 = arith.truncf %71 : vector<128x256xf32> to vector<128x256xbf16>
    %cst_20 = arith.constant dense<0.000000e+00> : vector<9x128xf32>
    %73 = tpu.matmul %63, %72, %cst_20 {dimension_numbers = #tpu.dot_dimension_numbers<[1], [1], [0], [0], [0, 0, 1, 0], [], []>} : vector<9x256xbf16>, vector<128x256xbf16>, vector<9x128xf32> -> vector<9x128xf32>
    %74 = vector.extract_strided_slice %73 {offsets = [8, 0], sizes = [1, 128], strides = [1, 1]} : vector<9x128xf32> to vector<1x128xf32>
    %cst_21 = arith.constant 1.000000e+00 : f32
    %75 = vector.broadcast %cst_21 : f32 to vector<1x128xf32>
    %76 = arith.divf %75, %74 : vector<1x128xf32>
    %77 = vector.extract_strided_slice %73 {offsets = [0, 0], sizes = [8, 128], strides = [1, 1]} : vector<9x128xf32> to vector<8x128xf32>
    %78 = vector.broadcast %76 : vector<1x128xf32> to vector<8x128xf32>
    %79 = arith.mulf %77, %78 : vector<8x128xf32>
    %80 = vector.extract_strided_slice %7 {offsets = [0, 256], sizes = [8, 128], strides = [1, 1]} : vector<8x512xf32> to vector<8x128xf32>
    %81 = arith.addf %79, %80 : vector<8x128xf32>
    %c1 = arith.constant 1 : index
    %c0_22 = arith.constant 0 : index
    %c0_23 = arith.constant 0 : index
    %82 = vector.load %arg3[%c1, %c0_22, %c0_23] : memref<2x8x256xf32, #tpu.memory_space<vmem>>, vector<1x8x128xf32>
    %83 = vector.shape_cast %82 : vector<1x8x128xf32> to vector<8x128xf32>
    %84 = vector.shape_cast %81 : vector<8x128xf32> to vector<1x8x128xf32>
    tpu.vector_store %arg3[%c1, %c0_22, %c0_23], %84 {strides = array<i32>} : memref<2x8x256xf32, #tpu.memory_space<vmem>>, vector<1x8x128xf32>,
    %85 = vector.extract_strided_slice %11 {offsets = [0, 384], sizes = [4, 128], strides = [1, 1]} : vector<4x512xf32> to vector<4x128xf32>
    %86 = arith.truncf %85 : vector<4x128xf32> to vector<4x128xbf16>
    %cst_24 = arith.constant dense<0.000000e+00> : vector<128x256xf32>
    %87 = tpu.matmul %86, %61, %cst_24 {dimension_numbers = #tpu.dot_dimension_numbers<[0], [0], [1], [1], [0, 1, 1, 1], [], []>} : vector<4x128xbf16>, vector<4x256xbf16>, vector<128x256xf32> -> vector<128x256xf32>
    %cst_25 = arith.constant dense<0xFF800000> : vector<128xf32>
    %88 = vector.multi_reduction <maximumf>, %87, %cst_25 [1] : vector<128x256xf32> to vector<128xf32>
    %89 = vector.shape_cast %88 : vector<128xf32> to vector<128x1xf32>
    %90 = vector.broadcast %89 : vector<128x1xf32> to vector<128x256xf32>
    %91 = arith.subf %87, %90 : vector<128x256xf32>
    %92 = math.exp %91 : vector<128x256xf32>
    %93 = arith.truncf %92 : vector<128x256xf32> to vector<128x256xbf16>
    %cst_26 = arith.constant dense<0.000000e+00> : vector<9x128xf32>
    %94 = tpu.matmul %63, %93, %cst_26 {dimension_numbers = #tpu.dot_dimension_numbers<[1], [1], [0], [0], [0, 0, 1, 0], [], []>} : vector<9x256xbf16>, vector<128x256xbf16>, vector<9x128xf32> -> vector<9x128xf32>
    %95 = vector.extract_strided_slice %94 {offsets = [8, 0], sizes = [1, 128], strides = [1, 1]} : vector<9x128xf32> to vector<1x128xf32>
    %cst_27 = arith.constant 1.000000e+00 : f32
    %96 = vector.broadcast %cst_27 : f32 to vector<1x128xf32>
    %97 = arith.divf %96, %95 : vector<1x128xf32>
    %98 = vector.extract_strided_slice %94 {offsets = [0, 0], sizes = [8, 128], strides = [1, 1]} : vector<9x128xf32> to vector<8x128xf32>
    %99 = vector.broadcast %97 : vector<1x128xf32> to vector<8x128xf32>
    %100 = arith.mulf %98, %99 : vector<8x128xf32>
    %101 = vector.extract_strided_slice %7 {offsets = [0, 384], sizes = [8, 128], strides = [1, 1]} : vector<8x512xf32> to vector<8x128xf32>
    %102 = arith.addf %100, %101 : vector<8x128xf32>
    %c1_28 = arith.constant 1 : index
    %c0_29 = arith.constant 0 : index
    %c128_30 = arith.constant 128 : index
    %103 = vector.load %arg3[%c1_28, %c0_29, %c128_30] : memref<2x8x256xf32, #tpu.memory_space<vmem>>, vector<1x8x128xf32>
    %104 = vector.shape_cast %103 : vector<1x8x128xf32> to vector<8x128xf32>
    %105 = vector.shape_cast %102 : vector<8x128xf32> to vector<1x8x128xf32>
    tpu.vector_store %arg3[%c1_28, %c0_29, %c128_30], %105 {strides = array<i32>} : memref<2x8x256xf32, #tpu.memory_space<vmem>>, vector<1x8x128xf32>,
    return
  }
  func.func @transform_0(%arg0: i32) -> (i32, i32) {
    %c0_i32 = arith.constant 0 : i32
    %c0_i32_0 = arith.constant 0 : i32
    return %c0_i32, %arg0 : i32, i32
  }
  func.func @transform_1(%arg0: i32) -> (i32, i32) {
    %c0_i32 = arith.constant 0 : i32
    %c0_i32_0 = arith.constant 0 : i32
    %c0_i32_1 = arith.constant 0 : i32
    return %c0_i32, %c0_i32_0 : i32, i32
  }
  func.func @transform_2(%arg0: i32) -> (i32, i32, i32) {
    %c0_i32 = arith.constant 0 : i32
    %c0_i32_0 = arith.constant 0 : i32
    %c0_i32_1 = arith.constant 0 : i32
    return %arg0, %c0_i32, %c0_i32_0 : i32, i32, i32
  }
}

</mosaic_0001>

<llo_original>
// kernel: attn_forward.1
$region0: #{attn_forward.1}
  #allocation0 [shape = 'u32[]', space=smem, size = 0x4, offset = 0x4, fixed_abs, tag = 'smem constant byte address 0x4 - core index']
  #allocation1 [shape = 'u32[144,128]{1,0:T(1,128)}', space=vmem, size = 0x12000, scoped, tag = 'internal scratch']
  %s0 = inlined_call_operand.vmem [shape: f32[37,512], index: 0, kind: input, shape index: {}]
  %s1 = inlined_call_operand.vmem [shape: f32[33,37], index: 1, kind: input, shape index: {}]
  %s2 = inlined_call_operand.vmem [shape: f32[2,8,256], index: 2, kind: output, shape index: {}]
  %s3 = sld [smem:[#allocation0]]
  $region18: #{attn_forward.1} parent=0
    _
  %s5 = ssub.s32 1, %s3
  %s6 = scalar_select 0, %s5, %s3
  // Predicated region
  $region2: #{attn_forward.1} parent=0 // pred_check
    _
  $region3: #{attn_forward.1} parent=0 // pred_check_branch
    %8 = sbr.rel (0) target = $region5
  $region4: #{attn_forward.1} parent=0 // pred_region
    _
  $region5: #{attn_forward.1} parent=0 // pred_fallthru
    _
  // Predicated region
  $region6: #{attn_forward.1} parent=0 // pred_check
    _
  $region7: #{attn_forward.1} parent=0 // pred_check_branch
    %10 = sbr.rel (0) target = $region9
  $region8: #{attn_forward.1} parent=0 // pred_region
    _
  $region9: #{attn_forward.1} parent=0 // pred_fallthru
    _
  %v12 = vld [vmem:[%s1] sm:$0xff]
  %v13 = vld [vmem:[%s1 + $0x8] sm:$0xff]
  %v14 = vld [vmem:[%s1 + $0x10] sm:$0xff]
  %v15 = vld [vmem:[%s1 + $0x18] sm:$0xff]
  %v16 = vld [vmem:[%s1 + $0x20] sm:$0x1]
  %v17 = vld [vmem:[%s0] sm:$0xff]
  %v18 = vld [vmem:[%s0 + $0x8] sm:$0xff]
  %v19 = vld [vmem:[%s0 + $0x10] sm:$0xff]
  %v20 = vld [vmem:[%s0 + $0x18] sm:$0xff]
  %v21 = vld [vmem:[%s0 + $0x20] sm:$0xff]
  %v22 = vld [vmem:[%s0 + $0x28] sm:$0xff]
  %v23 = vld [vmem:[%s0 + $0x30] sm:$0xff]
  %v24 = vld [vmem:[%s0 + $0x38] sm:$0xff]
  %v25 = vld [vmem:[%s0 + $0x40] sm:$0xff]
  %v26 = vld [vmem:[%s0 + $0x48] sm:$0xff]
  %v27 = vld [vmem:[%s0 + $0x50] sm:$0xff]
  %v28 = vld [vmem:[%s0 + $0x58] sm:$0xff]
  %v29 = vld [vmem:[%s0 + $0x60] sm:$0xff]
  %v30 = vld [vmem:[%s0 + $0x68] sm:$0xff]
  %v31 = vld [vmem:[%s0 + $0x70] sm:$0xff]
  %v32 = vld [vmem:[%s0 + $0x78] sm:$0xff]
  %v33 = vld [vmem:[%s0 + $0x80] sm:$0x1f]
  %v34 = vld [vmem:[%s0 + $0x88] sm:$0x1f]
  %v35 = vld [vmem:[%s0 + $0x90] sm:$0x1f]
  %v36 = vld [vmem:[%s0 + $0x98] sm:$0x1f]
  %vm37 = vcmask 302080
  %v39 = vsel %vm37, %v12, 0
  %vm41 = vcmask 1044480
  %v43 = vsel %vm41, %v33, 0
  %v46 = vsel %vm41, %v34, 0
  %v49 = vsel %vm41, %v35, 0
  %v52 = vsel %vm41, %v36, 0
  %54 = vmatprep.subr.mxu0 %v18
  %55 = vmatpush1.msra.mxu0 %v17
  %56 = vmatprep.subr.mxu0 %v22
  %57 = vmatpush1.msra.mxu0 %v21
  %58 = vmatprep.subr.mxu0 %v26
  %59 = vmatpush1.msra.mxu0 %v25
  %60 = vmatprep.subr.mxu0 %v30
  %61 = vmatpush1.msra.mxu0 %v29
  %62 = vmatprep.subr.mxu0 %v46
  %63 = vmatpush1.msra.mxu0 %v43
  %64 = vmatprep.subr.mxu0 0.0
  %65 = vmatpush1.msra.mxu0 0.0
  %66 = vmatprep.subr.mxu0 0.0
  %67 = vmatpush1.msra.mxu0 0.0
  %68 = vmatprep.subr.mxu0 0.0
  %69 = vmatpush1.msra.mxu0 0.0
  %70 = vmatprep.subr.mxu0 0.0
  %71 = vmatpush1.msra.mxu0 0.0
  %72 = vmatprep.subr.mxu0 0.0
  %73 = vmatpush1.msra.mxu0 0.0
  %74 = vmatprep.subr.mxu0 0.0
  %75 = vmatpush1.msra.mxu0 0.0
  %76 = vmatprep.subr.mxu0 0.0
  %77 = vmatpush1.msra.mxu0 0.0
  %78 = vmatprep.subr.mxu0 0.0
  %79 = vmatpush1.msra.mxu0 0.0
  %80 = vmatprep.subr.mxu0 0.0
  %81 = vmatpush1.msra.mxu0 0.0
  %82 = vmatprep.subr.mxu0 0.0
  %83 = vmatpush1.msra.mxu0 0.0
  %84 = vmatprep.subr.mxu0 0.0
  %85 = vmatpush1.msra.mxu0 0.0
  %86 = vmatprep.subr.mxu0 0.0
  %87 = vmatpush1.msra.mxu0 0.0
  %88 = vmatprep.subr.mxu0 0.0
  %89 = vmatpush1.msra.mxu0 0.0
  %90 = vmatprep.subr.mxu0 0.0
  %91 = vmatpush1.msra.mxu0 0.0
  %92 = vmatprep.subr.mxu0 0.0
  %93 = vmatpush1.msra.mxu0 0.0
  %94 = vmatprep.subr.mxu0 0.0
  %95 = vmatpush1.msra.mxu0 0.0
  %96 = vmatprep.subr.mxu0 0.0
  %97 = vmatpush1.msra.mxu0 0.0
  %98 = vmatprep.subr.mxu0 0.0
  %99 = vmatpush1.msra.mxu0 0.0
  %100 = vmatprep.subr.mxu0 0.0
  %101 = vmatpush1.msra.mxu0 0.0
  %102 = vmatprep.subr.mxu0 0.0
  %103 = vmatpush1.msra.mxu0 0.0
  %104 = vmatprep.subr.mxu0 0.0
  %105 = vmatpush1.msra.mxu0 0.0
  %106 = vmatprep.subr.mxu0 0.0
  %107 = vmatpush1.msra.mxu0 0.0
  %108 = vmatprep.subr.mxu0 0.0
  %109 = vmatpush1.msra.mxu0 0.0
  %110 = vmatprep.subr.mxu0 0.0
  %111 = vmatpush1.msra.mxu0 0.0
  %112 = vmatprep.subr.mxu0 0.0
  %113 = vmatpush1.msra.mxu0 0.0
  %114 = vmatprep.subr.mxu0 0.0
  %115 = vmatpush1.msra.mxu0 0.0
  %116 = vmatprep.subr.mxu0 0.0
  %117 = vmatpush1.msra.mxu0 0.0
  %118 = vmatprep.mubr.f32.mxu0 0.0
  %119 = vmatmul.mubr.f32.gmra.mrb[0].mxu0 %v39
  %v120 = vpop.f32.mrb[0].mxu0
  %v121 = vadd.f32 0.0, %v120
  %v122 = vpop.f32.mrb[0].mxu0
  %v123 = vadd.f32 0.0, %v122
  %124 = vdwg.mxu0
  %125 = vmatprep.subr.mxu0 %v20
  %126 = vmatpush1.msra.mxu0 %v19
  %127 = vmatprep.subr.mxu0 %v24
  %128 = vmatpush1.msra.mxu0 %v23
  %129 = vmatprep.subr.mxu0 %v28
  %130 = vmatpush1.msra.mxu0 %v27
  %131 = vmatprep.subr.mxu0 %v32
  %132 = vmatpush1.msra.mxu0 %v31
  %133 = vmatprep.subr.mxu0 %v52
  %134 = vmatpush1.msra.mxu0 %v49
  %135 = vmatprep.subr.mxu0 0.0
  %136 = vmatpush1.msra.mxu0 0.0
  %137 = vmatprep.subr.mxu0 0.0
  %138 = vmatpush1.msra.mxu0 0.0
  %139 = vmatprep.subr.mxu0 0.0
  %140 = vmatpush1.msra.mxu0 0.0
  %141 = vmatprep.subr.mxu0 0.0
  %142 = vmatpush1.msra.mxu0 0.0
  %143 = vmatprep.subr.mxu0 0.0
  %144 = vmatpush1.msra.mxu0 0.0
  %145 = vmatprep.subr.mxu0 0.0
  %146 = vmatpush1.msra.mxu0 0.0
  %147 = vmatprep.subr.mxu0 0.0
  %148 = vmatpush1.msra.mxu0 0.0
  %149 = vmatprep.subr.mxu0 0.0
  %150 = vmatpush1.msra.mxu0 0.0
  %151 = vmatprep.subr.mxu0 0.0
  %152 = vmatpush1.msra.mxu0 0.0
  %153 = vmatprep.subr.mxu0 0.0
  %154 = vmatpush1.msra.mxu0 0.0
  %155 = vmatprep.subr.mxu0 0.0
  %156 = vmatpush1.msra.mxu0 0.0
  %157 = vmatprep.subr.mxu0 0.0
  %158 = vmatpush1.msra.mxu0 0.0
  %159 = vmatprep.subr.mxu0 0.0
  %160 = vmatpush1.msra.mxu0 0.0
  %161 = vmatprep.subr.mxu0 0.0
  %162 = vmatpush1.msra.mxu0 0.0
  %163 = vmatprep.subr.mxu0 0.0
  %164 = vmatpush1.msra.mxu0 0.0
  %165 = vmatprep.subr.mxu0 0.0
  %166 = vmatpush1.msra.mxu0 0.0
  %167 = vmatprep.subr.mxu0 0.0
  %168 = vmatpush1.msra.mxu0 0.0
  %169 = vmatprep.subr.mxu0 0.0
  %170 = vmatpush1.msra.mxu0 0.0
  %171 = vmatprep.subr.mxu0 0.0
  %172 = vmatpush1.msra.mxu0 0.0
  %173 = vmatprep.subr.mxu0 0.0
  %174 = vmatpush1.msra.mxu0 0.0
  %175 = vmatprep.subr.mxu0 0.0
  %176 = vmatpush1.msra.mxu0 0.0
  %177 = vmatprep.subr.mxu0 0.0
  %178 = vmatpush1.msra.mxu0 0.0
  %179 = vmatprep.subr.mxu0 0.0
  %180 = vmatpush1.msra.mxu0 0.0
  %181 = vmatprep.subr.mxu0 0.0
  %182 = vmatpush1.msra.mxu0 0.0
  %183 = vmatprep.subr.mxu0 0.0
  %184 = vmatpush1.msra.mxu0 0.0
  %185 = vmatprep.subr.mxu0 0.0
  %186 = vmatpush1.msra.mxu0 0.0
  %187 = vmatprep.subr.mxu0 0.0
  %188 = vmatpush1.msra.mxu0 0.0
  %189 = vmatprep.mubr.f32.mxu0 0.0
  %190 = vmatmul.mubr.f32.gmra.mrb[0].mxu0 %v39
  %v191 = vpop.f32.mrb[0].mxu0
  %v192 = vadd.f32 0.0, %v191
  %v193 = vpop.f32.mrb[0].mxu0
  %v194 = vadd.f32 0.0, %v193
  %195 = vdwg.mxu0
  %v196 = vmax.f32 %v121, 0.0
  %v197 = vmax.f32 %v123, 0.0
  %v198 = vmax.f32 %v192, 0.0
  %v199 = vmax.f32 %v194, 0.0
  %201 = vset.pattern.permute.xlu0 8
  %202 = vperm.xlu0 %201, %v13
  %v203 = vpop.permute.xlu0 %202
  %206 = vset.pattern.permute.xlu0 8
  %207 = vperm.xlu0 %206, %v14
  %v208 = vpop.permute.xlu0 %207
  %211 = vset.pattern.permute.xlu0 8
  %212 = vperm.xlu0 %211, %v15
  %v213 = vpop.permute.xlu0 %212
  %216 = vset.pattern.permute.xlu0 8
  %217 = vperm.xlu0 %216, %v16
  %v218 = vpop.permute.xlu0 %217
  %vm220 = vcmask 64512
  %v221 = vsel %vm220, %v13, 0
  %v223 = vsel %vm220, %v14, 0
  %v225 = vsel %vm220, %v15, 0
  %v227 = vsel %vm220, %v16, 0
  %229 = vmatprep.subr.mxu0 %v197
  %230 = vmatpush1.msra.mxu0 %v196
  %231 = vmatprep.subr.mxu0 0.0
  %232 = vmatpush1.msra.mxu0 0.0
  %233 = vmatprep.subr.mxu0 0.0
  %234 = vmatpush1.msra.mxu0 0.0
  %235 = vmatprep.subr.mxu0 0.0
  %236 = vmatpush1.msra.mxu0 0.0
  %237 = vmatprep.subr.mxu0 0.0
  %238 = vmatpush1.msra.mxu0 0.0
  %239 = vmatprep.subr.mxu0 0.0
  %240 = vmatpush1.msra.mxu0 0.0
  %241 = vmatprep.subr.mxu0 0.0
  %242 = vmatpush1.msra.mxu0 0.0
  %243 = vmatprep.subr.mxu0 0.0
  %244 = vmatpush1.msra.mxu0 0.0
  %245 = vmatprep.subr.mxu0 0.0
  %246 = vmatpush1.msra.mxu0 0.0
  %247 = vmatprep.subr.mxu0 0.0
  %248 = vmatpush1.msra.mxu0 0.0
  %249 = vmatprep.subr.mxu0 0.0
  %250 = vmatpush1.msra.mxu0 0.0
  %251 = vmatprep.subr.mxu0 0.0
  %252 = vmatpush1.msra.mxu0 0.0
  %253 = vmatprep.subr.mxu0 0.0
  %254 = vmatpush1.msra.mxu0 0.0
  %255 = vmatprep.subr.mxu0 0.0
  %256 = vmatpush1.msra.mxu0 0.0
  %257 = vmatprep.subr.mxu0 0.0
  %258 = vmatpush1.msra.mxu0 0.0
  %259 = vmatprep.subr.mxu0 0.0
  %260 = vmatpush1.msra.mxu0 0.0
  %261 = vmatprep.subr.mxu0 0.0
  %262 = vmatpush1.msra.mxu0 0.0
  %263 = vmatprep.subr.mxu0 0.0
  %264 = vmatpush1.msra.mxu0 0.0
  %265 = vmatprep.subr.mxu0 0.0
  %266 = vmatpush1.msra.mxu0 0.0
  %267 = vmatprep.subr.mxu0 0.0
  %268 = vmatpush1.msra.mxu0 0.0
  %269 = vmatprep.subr.mxu0 0.0
  %270 = vmatpush1.msra.mxu0 0.0
  %271 = vmatprep.subr.mxu0 0.0
  %272 = vmatpush1.msra.mxu0 0.0
  %273 = vmatprep.subr.mxu0 0.0
  %274 = vmatpush1.msra.mxu0 0.0
  %275 = vmatprep.subr.mxu0 0.0
  %276 = vmatpush1.msra.mxu0 0.0
  %277 = vmatprep.subr.mxu0 0.0
  %278 = vmatpush1.msra.mxu0 0.0
  %279 = vmatprep.subr.mxu0 0.0
  %280 = vmatpush1.msra.mxu0 0.0
  %281 = vmatprep.subr.mxu0 0.0
  %282 = vmatpush1.msra.mxu0 0.0
  %283 = vmatprep.subr.mxu0 0.0
  %284 = vmatpush1.msra.mxu0 0.0
  %285 = vmatprep.subr.mxu0 0.0
  %286 = vmatpush1.msra.mxu0 0.0
  %287 = vmatprep.subr.mxu0 0.0
  %288 = vmatpush1.msra.mxu0 0.0
  %289 = vmatprep.subr.mxu0 0.0
  %290 = vmatpush1.msra.mxu0 0.0
  %291 = vmatprep.subr.mxu0 0.0
  %292 = vmatpush1.msra.mxu0 0.0
  %293 = vmatprep.mubr.f32.mxu0 0.0
  %294 = vmatmul.mubr.f32.gmra.mrb[0].mxu0 %v221
  %v295 = vpop.f32.mrb[0].mxu0
  %v296 = vadd.f32 %v203, %v295
  %v297 = vpop.f32.mrb[0].mxu0
  %v298 = vadd.f32 %v203, %v297
  %299 = vmatprep.mubr.f32.mxu0 0.0
  %300 = vmatmul.mubr.f32.gmra.mrb[0].mxu0 %v223
  %v301 = vpop.f32.mrb[0].mxu0
  %v302 = vadd.f32 %v208, %v301
  %v303 = vpop.f32.mrb[0].mxu0
  %v304 = vadd.f32 %v208, %v303
  %305 = vmatprep.mubr.f32.mxu0 0.0
  %306 = vmatmul.mubr.f32.gmra.mrb[0].mxu0 %v225
  %v307 = vpop.f32.mrb[0].mxu0
  %v308 = vadd.f32 %v213, %v307
  %v309 = vpop.f32.mrb[0].mxu0
  %v310 = vadd.f32 %v213, %v309
  %311 = vmatprep.mubr.f32.mxu0 0.0
  %312 = vmatmul.mubr.f32.gmra.mrb[0].mxu0 %v227
  %v313 = vpop.f32.mrb[0].mxu0
  %v314 = vadd.f32 %v218, %v313
  %v315 = vpop.f32.mrb[0].mxu0
  %v316 = vadd.f32 %v218, %v315
  %317 = vdwg.mxu0
  %318 = vmatprep.subr.mxu0 %v199
  %319 = vmatpush1.msra.mxu0 %v198
  %320 = vmatprep.subr.mxu0 0.0
  %321 = vmatpush1.msra.mxu0 0.0
  %322 = vmatprep.subr.mxu0 0.0
  %323 = vmatpush1.msra.mxu0 0.0
  %324 = vmatprep.subr.mxu0 0.0
  %325 = vmatpush1.msra.mxu0 0.0
  %326 = vmatprep.subr.mxu0 0.0
  %327 = vmatpush1.msra.mxu0 0.0
  %328 = vmatprep.subr.mxu0 0.0
  %329 = vmatpush1.msra.mxu0 0.0
  %330 = vmatprep.subr.mxu0 0.0
  %331 = vmatpush1.msra.mxu0 0.0
  %332 = vmatprep.subr.mxu0 0.0
  %333 = vmatpush1.msra.mxu0 0.0
  %334 = vmatprep.subr.mxu0 0.0
  %335 = vmatpush1.msra.mxu0 0.0
  %336 = vmatprep.subr.mxu0 0.0
  %337 = vmatpush1.msra.mxu0 0.0
  %338 = vmatprep.subr.mxu0 0.0
  %339 = vmatpush1.msra.mxu0 0.0
  %340 = vmatprep.subr.mxu0 0.0
  %341 = vmatpush1.msra.mxu0 0.0
  %342 = vmatprep.subr.mxu0 0.0
  %343 = vmatpush1.msra.mxu0 0.0
  %344 = vmatprep.subr.mxu0 0.0
  %345 = vmatpush1.msra.mxu0 0.0
  %346 = vmatprep.subr.mxu0 0.0
  %347 = vmatpush1.msra.mxu0 0.0
  %348 = vmatprep.subr.mxu0 0.0
  %349 = vmatpush1.msra.mxu0 0.0
  %350 = vmatprep.subr.mxu0 0.0
  %351 = vmatpush1.msra.mxu0 0.0
  %352 = vmatprep.subr.mxu0 0.0
  %353 = vmatpush1.msra.mxu0 0.0
  %354 = vmatprep.subr.mxu0 0.0
  %355 = vmatpush1.msra.mxu0 0.0
  %356 = vmatprep.subr.mxu0 0.0
  %357 = vmatpush1.msra.mxu0 0.0
  %358 = vmatprep.subr.mxu0 0.0
  %359 = vmatpush1.msra.mxu0 0.0
  %360 = vmatprep.subr.mxu0 0.0
  %361 = vmatpush1.msra.mxu0 0.0
  %362 = vmatprep.subr.mxu0 0.0
  %363 = vmatpush1.msra.mxu0 0.0
  %364 = vmatprep.subr.mxu0 0.0
  %365 = vmatpush1.msra.mxu0 0.0
  %366 = vmatprep.subr.mxu0 0.0
  %367 = vmatpush1.msra.mxu0 0.0
  %368 = vmatprep.subr.mxu0 0.0
  %369 = vmatpush1.msra.mxu0 0.0
  %370 = vmatprep.subr.mxu0 0.0
  %371 = vmatpush1.msra.mxu0 0.0
  %372 = vmatprep.subr.mxu0 0.0
  %373 = vmatpush1.msra.mxu0 0.0
  %374 = vmatprep.subr.mxu0 0.0
  %375 = vmatpush1.msra.mxu0 0.0
  %376 = vmatprep.subr.mxu0 0.0
  %377 = vmatpush1.msra.mxu0 0.0
  %378 = vmatprep.subr.mxu0 0.0
  %379 = vmatpush1.msra.mxu0 0.0
  %380 = vmatprep.subr.mxu0 0.0
  %381 = vmatpush1.msra.mxu0 0.0
  %382 = vmatprep.mubr.f32.mxu0 0.0
  %383 = vmatmul.mubr.f32.gmra.mrb[0].mxu0 %v221
  %v384 = vpop.f32.mrb[0].mxu0
  %v385 = vadd.f32 %v203, %v384
  %v386 = vpop.f32.mrb[0].mxu0
  %v387 = vadd.f32 %v203, %v386
  %388 = vmatprep.mubr.f32.mxu0 0.0
  %389 = vmatmul.mubr.f32.gmra.mrb[0].mxu0 %v223
  %v390 = vpop.f32.mrb[0].mxu0
  %v391 = vadd.f32 %v208, %v390
  %v392 = vpop.f32.mrb[0].mxu0
  %v393 = vadd.f32 %v208, %v392
  %394 = vmatprep.mubr.f32.mxu0 0.0
  %395 = vmatmul.mubr.f32.gmra.mrb[0].mxu0 %v225
  %v396 = vpop.f32.mrb[0].mxu0
  %v397 = vadd.f32 %v213, %v396
  %v398 = vpop.f32.mrb[0].mxu0
  %v399 = vadd.f32 %v213, %v398
  %400 = vmatprep.mubr.f32.mxu0 0.0
  %401 = vmatmul.mubr.f32.gmra.mrb[0].mxu0 %v227
  %v402 = vpop.f32.mrb[0].mxu0
  %v403 = vadd.f32 %v218, %v402
  %v404 = vpop.f32.mrb[0].mxu0
  %v405 = vadd.f32 %v218, %v404
  %406 = vdwg.mxu0
  %v407 = vpack.c.bf16 %v302, %v302
  %v408 = vpack.c.bf16 %v304, %v304
  %v409 = vpack.c.bf16 %v314, %v308
  %v410 = vpack.c.bf16 %v316, %v310
  %v411 = vpack.c.bf16 %v296, %v296
  %412 = vxpose.xlu0.c.b16.start [1/8] %v411, 128
  %413 = vxpose.xlu0.c.b16.cont [2/8] 0, 128
  %414 = vxpose.xlu0.c.b16.cont [3/8] 0, 128
  %415 = vxpose.xlu0.c.b16.cont [4/8] 0, 128
  %416 = vxpose.xlu0.c.b16.cont [5/8] 0, 128
  %417 = vxpose.xlu0.c.b16.cont [6/8] 0, 128
  %418 = vxpose.xlu0.c.b16.cont [7/8] 0, 128
  %419 = vxpose.xlu0.c.b16.end [8/8] 0, 128
  %v420 = vpop.trf.xlu0
  %v421 = vpop.trf.xlu0
  %v422 = vpop.trf.xlu0
  %v423 = vpop.trf.xlu0
  %v424 = vpop.trf.xlu0
  %v425 = vpop.trf.xlu0
  %v426 = vpop.trf.xlu0
  %v427 = vpop.trf.xlu0
  %vm428 = vcmask 31744
  %v430 = vsel %vm428, %v420, 0
  %v433 = vsel %vm428, %v421, 0
  %v436 = vsel %vm428, %v422, 0
  %v439 = vsel %vm428, %v423, 0
  %v442 = vsel %vm428, %v424, 0
  %v445 = vsel %vm428, %v425, 0
  %v448 = vsel %vm428, %v426, 0
  %v451 = vsel %vm428, %v427, 0
  %vm453 = vcmask 1041408
  %v455 = vsel %vm453, %v407, 0
  %v458 = vsel %vm453, %v408, 0
  %460 = vmatprep.subr.bf16.mxu0 %v458
  %461 = vmatpush1.bf16.msra.mxu0 %v455
  %462 = vmatprep.subr.bf16.mxu0 0
  %463 = vmatpush1.bf16.msra.mxu0 0
  %464 = vmatprep.subr.bf16.mxu0 0
  %465 = vmatpush1.bf16.msra.mxu0 0
  %466 = vmatprep.subr.bf16.mxu0 0
  %467 = vmatpush1.bf16.msra.mxu0 0
  %468 = vmatprep.subr.bf16.mxu0 0
  %469 = vmatpush1.bf16.msra.mxu0 0
  %470 = vmatprep.subr.bf16.mxu0 0
  %471 = vmatpush1.bf16.msra.mxu0 0
  %472 = vmatprep.subr.bf16.mxu0 0
  %473 = vmatpush1.bf16.msra.mxu0 0
  %474 = vmatprep.subr.bf16.mxu0 0
  %475 = vmatpush1.bf16.msra.mxu0 0
  %476 = vmatprep.subr.bf16.mxu0 0
  %477 = vmatpush1.bf16.msra.mxu0 0
  %478 = vmatprep.subr.bf16.mxu0 0
  %479 = vmatpush1.bf16.msra.mxu0 0
  %480 = vmatprep.subr.bf16.mxu0 0
  %481 = vmatpush1.bf16.msra.mxu0 0
  %482 = vmatprep.subr.bf16.mxu0 0
  %483 = vmatpush1.bf16.msra.mxu0 0
  %484 = vmatprep.subr.bf16.mxu0 0
  %485 = vmatpush1.bf16.msra.mxu0 0
  %486 = vmatprep.subr.bf16.mxu0 0
  %487 = vmatpush1.bf16.msra.mxu0 0
  %488 = vmatprep.subr.bf16.mxu0 0
  %489 = vmatpush1.bf16.msra.mxu0 0
  %490 = vmatprep.subr.bf16.mxu0 0
  %491 = vmatpush1.bf16.msra.mxu0 0
  %492 = vmatprep.mubr.bf16.mxu0 0
  %493 = vmatmul.mubr.bf16.gmra.mrb[0].mxu0 %v430
  %v494 = vpop.f32.mrb[0].mxu0
  %v495 = vadd.f32 0.0, %v494
  %v496 = vpop.f32.mrb[0].mxu0
  %v497 = vadd.f32 0.0, %v496
  %v498 = vpop.f32.mrb[0].mxu0
  %v499 = vadd.f32 0.0, %v498
  %v500 = vpop.f32.mrb[0].mxu0
  %v501 = vadd.f32 0.0, %v500
  %502 = vmatprep.mubr.bf16.mxu0 0
  %503 = vmatmul.mubr.bf16.gmra.mrb[0].mxu0 %v433
  %v504 = vpop.f32.mrb[0].mxu0
  %v505 = vadd.f32 0.0, %v504
  %v506 = vpop.f32.mrb[0].mxu0
  %v507 = vadd.f32 0.0, %v506
  %v508 = vpop.f32.mrb[0].mxu0
  %v509 = vadd.f32 0.0, %v508
  %v510 = vpop.f32.mrb[0].mxu0
  %v511 = vadd.f32 0.0, %v510
  %512 = vmatprep.mubr.bf16.mxu0 0
  %513 = vmatmul.mubr.bf16.gmra.mrb[0].mxu0 %v436
  %v514 = vpop.f32.mrb[0].mxu0
  %v515 = vadd.f32 0.0, %v514
  %v516 = vpop.f32.mrb[0].mxu0
  %v517 = vadd.f32 0.0, %v516
  %v518 = vpop.f32.mrb[0].mxu0
  %v519 = vadd.f32 0.0, %v518
  %v520 = vpop.f32.mrb[0].mxu0
  %v521 = vadd.f32 0.0, %v520
  %522 = vmatprep.mubr.bf16.mxu0 0
  %523 = vmatmul.mubr.bf16.gmra.mrb[0].mxu0 %v439
  %v524 = vpop.f32.mrb[0].mxu0
  %v525 = vadd.f32 0.0, %v524
  %v526 = vpop.f32.mrb[0].mxu0
  %v527 = vadd.f32 0.0, %v526
  %v528 = vpop.f32.mrb[0].mxu0
  %v529 = vadd.f32 0.0, %v528
  %v530 = vpop.f32.mrb[0].mxu0
  %v531 = vadd.f32 0.0, %v530
  %532 = vmatprep.mubr.bf16.mxu0 0
  %533 = vmatmul.mubr.bf16.gmra.mrb[0].mxu0 %v442
  %v534 = vpop.f32.mrb[0].mxu0
  %v535 = vadd.f32 0.0, %v534
  %v536 = vpop.f32.mrb[0].mxu0
  %v537 = vadd.f32 0.0, %v536
  %v538 = vpop.f32.mrb[0].mxu0
  %v539 = vadd.f32 0.0, %v538
  %v540 = vpop.f32.mrb[0].mxu0
  %v541 = vadd.f32 0.0, %v540
  %542 = vmatprep.mubr.bf16.mxu0 0
  %543 = vmatmul.mubr.bf16.gmra.mrb[0].mxu0 %v445
  %v544 = vpop.f32.mrb[0].mxu0
  %v545 = vadd.f32 0.0, %v544
  %v546 = vpop.f32.mrb[0].mxu0
  %v547 = vadd.f32 0.0, %v546
  %v548 = vpop.f32.mrb[0].mxu0
  %v549 = vadd.f32 0.0, %v548
  %v550 = vpop.f32.mrb[0].mxu0
  %v551 = vadd.f32 0.0, %v550
  %552 = vmatprep.mubr.bf16.mxu0 0
  %553 = vmatmul.mubr.bf16.gmra.mrb[0].mxu0 %v448
  %v554 = vpop.f32.mrb[0].mxu0
  %v555 = vadd.f32 0.0, %v554
  %v556 = vpop.f32.mrb[0].mxu0
  %v557 = vadd.f32 0.0, %v556
  %v558 = vpop.f32.mrb[0].mxu0
  %v559 = vadd.f32 0.0, %v558
  %v560 = vpop.f32.mrb[0].mxu0
  %v561 = vadd.f32 0.0, %v560
  %562 = vmatprep.mubr.bf16.mxu0 0
  %563 = vmatmul.mubr.bf16.gmra.mrb[0].mxu0 %v451
  %v564 = vpop.f32.mrb[0].mxu0
  %v565 = vadd.f32 0.0, %v564
  %v566 = vpop.f32.mrb[0].mxu0
  %v567 = vadd.f32 0.0, %v566
  %v568 = vpop.f32.mrb[0].mxu0
  %v569 = vadd.f32 0.0, %v568
  %v570 = vpop.f32.mrb[0].mxu0
  %v571 = vadd.f32 0.0, %v570
  %572 = vdwg.mxu0
  %v573 = vmax.f32 %v495, %v497
  %574 = vmax.xlane.f32.xlu0 %v573
  %v575 = vpop.xlane.xlu0 %574
  %v576 = vmax.f32 %v499, %v501
  %577 = vmax.xlane.f32.xlu0 %v576
  %v578 = vpop.xlane.xlu0 %577
  %v579 = vmax.f32 %v505, %v507
  %580 = vmax.xlane.f32.xlu0 %v579
  %v581 = vpop.xlane.xlu0 %580
  %v582 = vmax.f32 %v509, %v511
  %583 = vmax.xlane.f32.xlu0 %v582
  %v584 = vpop.xlane.xlu0 %583
  %v585 = vmax.f32 %v515, %v517
  %586 = vmax.xlane.f32.xlu0 %v585
  %v587 = vpop.xlane.xlu0 %586
  %v588 = vmax.f32 %v519, %v521
  %589 = vmax.xlane.f32.xlu0 %v588
  %v590 = vpop.xlane.xlu0 %589
  %v591 = vmax.f32 %v525, %v527
  %592 = vmax.xlane.f32.xlu0 %v591
  %v593 = vpop.xlane.xlu0 %592
  %v594 = vmax.f32 %v529, %v531
  %595 = vmax.xlane.f32.xlu0 %v594
  %v596 = vpop.xlane.xlu0 %595
  %v597 = vmax.f32 %v535, %v537
  %598 = vmax.xlane.f32.xlu0 %v597
  %v599 = vpop.xlane.xlu0 %598
  %v600 = vmax.f32 %v539, %v541
  %601 = vmax.xlane.f32.xlu0 %v600
  %v602 = vpop.xlane.xlu0 %601
  %v603 = vmax.f32 %v545, %v547
  %604 = vmax.xlane.f32.xlu0 %v603
  %v605 = vpop.xlane.xlu0 %604
  %v606 = vmax.f32 %v549, %v551
  %607 = vmax.xlane.f32.xlu0 %v606
  %v608 = vpop.xlane.xlu0 %607
  %v609 = vmax.f32 %v555, %v557
  %610 = vmax.xlane.f32.xlu0 %v609
  %v611 = vpop.xlane.xlu0 %610
  %v612 = vmax.f32 %v559, %v561
  %613 = vmax.xlane.f32.xlu0 %v612
  %v614 = vpop.xlane.xlu0 %613
  %v615 = vmax.f32 %v565, %v567
  %616 = vmax.xlane.f32.xlu0 %v615
  %v617 = vpop.xlane.xlu0 %616
  %v618 = vmax.f32 %v569, %v571
  %619 = vmax.xlane.f32.xlu0 %v618
  %v620 = vpop.xlane.xlu0 %619
  %v621 = vsub.f32 %v495, %v575
  %v622 = vsub.f32 %v497, %v575
  %v623 = vsub.f32 %v499, %v578
  %v624 = vsub.f32 %v501, %v578
  %v625 = vsub.f32 %v505, %v581
  %v626 = vsub.f32 %v507, %v581
  %v627 = vsub.f32 %v509, %v584
  %v628 = vsub.f32 %v511, %v584
  %v629 = vsub.f32 %v515, %v587
  %v630 = vsub.f32 %v517, %v587
  %v631 = vsub.f32 %v519, %v590
  %v632 = vsub.f32 %v521, %v590
  %v633 = vsub.f32 %v525, %v593
  %v634 = vsub.f32 %v527, %v593
  %v635 = vsub.f32 %v529, %v596
  %v636 = vsub.f32 %v531, %v596
  %v637 = vsub.f32 %v535, %v599
  %v638 = vsub.f32 %v537, %v599
  %v639 = vsub.f32 %v539, %v602
  %v640 = vsub.f32 %v541, %v602
  %v641 = vsub.f32 %v545, %v605
  %v642 = vsub.f32 %v547, %v605
  %v643 = vsub.f32 %v549, %v608
  %v644 = vsub.f32 %v551, %v608
  %v645 = vsub.f32 %v555, %v611
  %v646 = vsub.f32 %v557, %v611
  %v647 = vsub.f32 %v559, %v614
  %v648 = vsub.f32 %v561, %v614
  %v649 = vsub.f32 %v565, %v617
  %v650 = vsub.f32 %v567, %v617
  %v651 = vsub.f32 %v569, %v620
  %v652 = vsub.f32 %v571, %v620
  %v653 = vmul.f32 %v621, 1.442695
  %v654 = vpow.pop %v653
  %v655 = vmul.f32 %v622, 1.442695
  %v656 = vpow.pop %v655
  %v657 = vmul.f32 %v623, 1.442695
  %v658 = vpow.pop %v657
  %v659 = vmul.f32 %v624, 1.442695
  %v660 = vpow.pop %v659
  %v661 = vmul.f32 %v625, 1.442695
  %v662 = vpow.pop %v661
  %v663 = vmul.f32 %v626, 1.442695
  %v664 = vpow.pop %v663
  %v665 = vmul.f32 %v627, 1.442695
  %v666 = vpow.pop %v665
  %v667 = vmul.f32 %v628, 1.442695
  %v668 = vpow.pop %v667
  %v669 = vmul.f32 %v629, 1.442695
  %v670 = vpow.pop %v669
  %v671 = vmul.f32 %v630, 1.442695
  %v672 = vpow.pop %v671
  %v673 = vmul.f32 %v631, 1.442695
  %v674 = vpow.pop %v673
  %v675 = vmul.f32 %v632, 1.442695
  %v676 = vpow.pop %v675
  %v677 = vmul.f32 %v633, 1.442695
  %v678 = vpow.pop %v677
  %v679 = vmul.f32 %v634, 1.442695
  %v680 = vpow.pop %v679
  %v681 = vmul.f32 %v635, 1.442695
  %v682 = vpow.pop %v681
  %v683 = vmul.f32 %v636, 1.442695
  %v684 = vpow.pop %v683
  %v685 = vmul.f32 %v637, 1.442695
  %v686 = vpow.pop %v685
  %v687 = vmul.f32 %v638, 1.442695
  %v688 = vpow.pop %v687
  %v689 = vmul.f32 %v639, 1.442695
  %v690 = vpow.pop %v689
  %v691 = vmul.f32 %v640, 1.442695
  %v692 = vpow.pop %v691
  %v693 = vmul.f32 %v641, 1.442695
  %v694 = vpow.pop %v693
  %v695 = vmul.f32 %v642, 1.442695
  %v696 = vpow.pop %v695
  %v697 = vmul.f32 %v643, 1.442695
  %v698 = vpow.pop %v697
  %v699 = vmul.f32 %v644, 1.442695
  %v700 = vpow.pop %v699
  %v701 = vmul.f32 %v645, 1.442695
  %v702 = vpow.pop %v701
  %v703 = vmul.f32 %v646, 1.442695
  %v704 = vpow.pop %v703
  %v705 = vmul.f32 %v647, 1.442695
  %v706 = vpow.pop %v705
  %v707 = vmul.f32 %v648, 1.442695
  %v708 = vpow.pop %v707
  %v709 = vmul.f32 %v649, 1.442695
  %v710 = vpow.pop %v709
  %v711 = vmul.f32 %v650, 1.442695
  %v712 = vpow.pop %v711
  %v713 = vmul.f32 %v651, 1.442695
  %v714 = vpow.pop %v713
  %v715 = vmul.f32 %v652, 1.442695
  %v716 = vpow.pop %v715
  %v717 = vpack.c.bf16 %v658, %v654
  %v718 = vpack.c.bf16 %v660, %v656
  %v719 = vpack.c.bf16 %v666, %v662
  %v720 = vpack.c.bf16 %v668, %v664
  %v721 = vpack.c.bf16 %v674, %v670
  %v722 = vpack.c.bf16 %v676, %v672
  %v723 = vpack.c.bf16 %v682, %v678
  %v724 = vpack.c.bf16 %v684, %v680
  %v725 = vpack.c.bf16 %v690, %v686
  %v726 = vpack.c.bf16 %v692, %v688
  %v727 = vpack.c.bf16 %v698, %v694
  %v728 = vpack.c.bf16 %v700, %v696
  %v729 = vpack.c.bf16 %v706, %v702
  %v730 = vpack.c.bf16 %v708, %v704
  %v731 = vpack.c.bf16 %v714, %v710
  %v732 = vpack.c.bf16 %v716, %v712
  %733 = vmatprep.subr.bf16.mxu0 %v718
  %734 = vmatpush1.bf16.xpose.msra.mxu0 %v717
  %735 = vmatprep.subr.bf16.mxu0 %v720
  %736 = vmatpush1.bf16.xpose.msra.mxu0 %v719
  %737 = vmatprep.subr.bf16.mxu0 %v722
  %738 = vmatpush1.bf16.xpose.msra.mxu0 %v721
  %739 = vmatprep.subr.bf16.mxu0 %v724
  %740 = vmatpush1.bf16.xpose.msra.mxu0 %v723
  %741 = vmatprep.subr.bf16.mxu0 %v726
  %742 = vmatpush1.bf16.xpose.msra.mxu0 %v725
  %743 = vmatprep.subr.bf16.mxu0 %v728
  %744 = vmatpush1.bf16.xpose.msra.mxu0 %v727
  %745 = vmatprep.subr.bf16.mxu0 %v730
  %746 = vmatpush1.bf16.xpose.msra.mxu0 %v729
  %747 = vmatprep.subr.bf16.mxu0 %v732
  %748 = vmatpush1.bf16.xpose.msra.mxu0 %v731
  %749 = vmatprep.subr.bf16.mxu0 0
  %750 = vmatpush1.bf16.xpose.msra.mxu0 0
  %751 = vmatprep.subr.bf16.mxu0 0
  %752 = vmatpush1.bf16.xpose.msra.mxu0 0
  %753 = vmatprep.subr.bf16.mxu0 0
  %754 = vmatpush1.bf16.xpose.msra.mxu0 0
  %755 = vmatprep.subr.bf16.mxu0 0
  %756 = vmatpush1.bf16.xpose.msra.mxu0 0
  %757 = vmatprep.subr.bf16.mxu0 0
  %758 = vmatpush1.bf16.xpose.msra.mxu0 0
  %759 = vmatprep.subr.bf16.mxu0 0
  %760 = vmatpush1.bf16.xpose.msra.mxu0 0
  %761 = vmatprep.subr.bf16.mxu0 0
  %762 = vmatpush1.bf16.xpose.msra.mxu0 0
  %763 = vmatprep.subr.bf16.mxu0 0
  %764 = vmatpush1.bf16.xpose.msra.mxu0 0
  %765 = vmatprep.mubr.bf16.mxu0 %v410
  %766 = vmatmul.mubr.bf16.gmra.mrb[0].mxu0 %v409
  %v767 = vpop.f32.mrb[0].mxu0
  %v768 = vadd.f32 0.0, %v767
  %v769 = vpop.f32.mrb[0].mxu0
  %v770 = vpop.f32.mrb[0].mxu0
  %v771 = vadd.f32 0.0, %v770
  %v772 = vpop.f32.mrb[0].mxu0
  %773 = vdwg.mxu0
  %v774 = vrcp.pop %v771
  %v775 = vmul.f32 1.0, %v774
  %v776 = vlaneseq
  %v777 = vshrl.u32 %v776, 7
  %v778 = vsub.s32 0, %v777
  %v779 = vrot.slane %v775, %v778
  %v780 = vmul.f32 %v768, %v779
  %v781 = vadd.f32 %v780, %v196
  %782 = vst [vmem:[%s2] sm:$0xff] %v781
  %v783 = vpack.c.bf16 %v298, %v298
  %784 = vxpose.xlu0.c.b16.start [1/8] %v783, 128
  %785 = vxpose.xlu0.c.b16.cont [2/8] 0, 128
  %786 = vxpose.xlu0.c.b16.cont [3/8] 0, 128
  %787 = vxpose.xlu0.c.b16.cont [4/8] 0, 128
  %788 = vxpose.xlu0.c.b16.cont [5/8] 0, 128
  %789 = vxpose.xlu0.c.b16.cont [6/8] 0, 128
  %790 = vxpose.xlu0.c.b16.cont [7/8] 0, 128
  %791 = vxpose.xlu0.c.b16.end [8/8] 0, 128
  %v792 = vpop.trf.xlu0
  %v793 = vpop.trf.xlu0
  %v794 = vpop.trf.xlu0
  %v795 = vpop.trf.xlu0
  %v796 = vpop.trf.xlu0
  %v797 = vpop.trf.xlu0
  %v798 = vpop.trf.xlu0
  %v799 = vpop.trf.xlu0
  %v801 = vsel %vm428, %v792, 0
  %v804 = vsel %vm428, %v793, 0
  %v807 = vsel %vm428, %v794, 0
  %v810 = vsel %vm428, %v795, 0
  %v813 = vsel %vm428, %v796, 0
  %v816 = vsel %vm428, %v797, 0
  %v819 = vsel %vm428, %v798, 0
  %v822 = vsel %vm428, %v799, 0
  %824 = vmatprep.subr.bf16.mxu0 %v458
  %825 = vmatpush1.bf16.msra.mxu0 %v455
  %826 = vmatprep.subr.bf16.mxu0 0
  %827 = vmatpush1.bf16.msra.mxu0 0
  %828 = vmatprep.subr.bf16.mxu0 0
  %829 = vmatpush1.bf16.msra.mxu0 0
  %830 = vmatprep.subr.bf16.mxu0 0
  %831 = vmatpush1.bf16.msra.mxu0 0
  %832 = vmatprep.subr.bf16.mxu0 0
  %833 = vmatpush1.bf16.msra.mxu0 0
  %834 = vmatprep.subr.bf16.mxu0 0
  %835 = vmatpush1.bf16.msra.mxu0 0
  %836 = vmatprep.subr.bf16.mxu0 0
  %837 = vmatpush1.bf16.msra.mxu0 0
  %838 = vmatprep.subr.bf16.mxu0 0
  %839 = vmatpush1.bf16.msra.mxu0 0
  %840 = vmatprep.subr.bf16.mxu0 0
  %841 = vmatpush1.bf16.msra.mxu0 0
  %842 = vmatprep.subr.bf16.mxu0 0
  %843 = vmatpush1.bf16.msra.mxu0 0
  %844 = vmatprep.subr.bf16.mxu0 0
  %845 = vmatpush1.bf16.msra.mxu0 0
  %846 = vmatprep.subr.bf16.mxu0 0
  %847 = vmatpush1.bf16.msra.mxu0 0
  %848 = vmatprep.subr.bf16.mxu0 0
  %849 = vmatpush1.bf16.msra.mxu0 0
  %850 = vmatprep.subr.bf16.mxu0 0
  %851 = vmatpush1.bf16.msra.mxu0 0
  %852 = vmatprep.subr.bf16.mxu0 0
  %853 = vmatpush1.bf16.msra.mxu0 0
  %854 = vmatprep.subr.bf16.mxu0 0
  %855 = vmatpush1.bf16.msra.mxu0 0
  %856 = vmatprep.mubr.bf16.mxu0 0
  %857 = vmatmul.mubr.bf16.gmra.mrb[0].mxu0 %v801
  %v858 = vpop.f32.mrb[0].mxu0
  %v859 = vadd.f32 0.0, %v858
  %v860 = vpop.f32.mrb[0].mxu0
  %v861 = vadd.f32 0.0, %v860
  %v862 = vpop.f32.mrb[0].mxu0
  %v863 = vadd.f32 0.0, %v862
  %v864 = vpop.f32.mrb[0].mxu0
  %v865 = vadd.f32 0.0, %v864
  %866 = vmatprep.mubr.bf16.mxu0 0
  %867 = vmatmul.mubr.bf16.gmra.mrb[0].mxu0 %v804
  %v868 = vpop.f32.mrb[0].mxu0
  %v869 = vadd.f32 0.0, %v868
  %v870 = vpop.f32.mrb[0].mxu0
  %v871 = vadd.f32 0.0, %v870
  %v872 = vpop.f32.mrb[0].mxu0
  %v873 = vadd.f32 0.0, %v872
  %v874 = vpop.f32.mrb[0].mxu0
  %v875 = vadd.f32 0.0, %v874
  %876 = vmatprep.mubr.bf16.mxu0 0
  %877 = vmatmul.mubr.bf16.gmra.mrb[0].mxu0 %v807
  %v878 = vpop.f32.mrb[0].mxu0
  %v879 = vadd.f32 0.0, %v878
  %v880 = vpop.f32.mrb[0].mxu0
  %v881 = vadd.f32 0.0, %v880
  %v882 = vpop.f32.mrb[0].mxu0
  %v883 = vadd.f32 0.0, %v882
  %v884 = vpop.f32.mrb[0].mxu0
  %v885 = vadd.f32 0.0, %v884
  %886 = vmatprep.mubr.bf16.mxu0 0
  %887 = vmatmul.mubr.bf16.gmra.mrb[0].mxu0 %v810
  %v888 = vpop.f32.mrb[0].mxu0
  %v889 = vadd.f32 0.0, %v888
  %v890 = vpop.f32.mrb[0].mxu0
  %v891 = vadd.f32 0.0, %v890
  %v892 = vpop.f32.mrb[0].mxu0
  %v893 = vadd.f32 0.0, %v892
  %v894 = vpop.f32.mrb[0].mxu0
  %v895 = vadd.f32 0.0, %v894
  %896 = vmatprep.mubr.bf16.mxu0 0
  %897 = vmatmul.mubr.bf16.gmra.mrb[0].mxu0 %v813
  %v898 = vpop.f32.mrb[0].mxu0
  %v899 = vadd.f32 0.0, %v898
  %v900 = vpop.f32.mrb[0].mxu0
  %v901 = vadd.f32 0.0, %v900
  %v902 = vpop.f32.mrb[0].mxu0
  %v903 = vadd.f32 0.0, %v902
  %v904 = vpop.f32.mrb[0].mxu0
  %v905 = vadd.f32 0.0, %v904
  %906 = vmatprep.mubr.bf16.mxu0 0
  %907 = vmatmul.mubr.bf16.gmra.mrb[0].mxu0 %v816
  %v908 = vpop.f32.mrb[0].mxu0
  %v909 = vadd.f32 0.0, %v908
  %v910 = vpop.f32.mrb[0].mxu0
  %v911 = vadd.f32 0.0, %v910
  %v912 = vpop.f32.mrb[0].mxu0
  %v913 = vadd.f32 0.0, %v912
  %v914 = vpop.f32.mrb[0].mxu0
  %v915 = vadd.f32 0.0, %v914
  %916 = vmatprep.mubr.bf16.mxu0 0
  %917 = vmatmul.mubr.bf16.gmra.mrb[0].mxu0 %v819
  %v918 = vpop.f32.mrb[0].mxu0
  %v919 = vadd.f32 0.0, %v918
  %v920 = vpop.f32.mrb[0].mxu0
  %v921 = vadd.f32 0.0, %v920
  %v922 = vpop.f32.mrb[0].mxu0
  %v923 = vadd.f32 0.0, %v922
  %v924 = vpop.f32.mrb[0].mxu0
  %v925 = vadd.f32 0.0, %v924
  %926 = vmatprep.mubr.bf16.mxu0 0
  %927 = vmatmul.mubr.bf16.gmra.mrb[0].mxu0 %v822
  %v928 = vpop.f32.mrb[0].mxu0
  %v929 = vadd.f32 0.0, %v928
  %v930 = vpop.f32.mrb[0].mxu0
  %v931 = vadd.f32 0.0, %v930
  %v932 = vpop.f32.mrb[0].mxu0
  %v933 = vadd.f32 0.0, %v932
  %v934 = vpop.f32.mrb[0].mxu0
  %v935 = vadd.f32 0.0, %v934
  %936 = vdwg.mxu0
  %v937 = vmax.f32 %v859, %v861
  %938 = vmax.xlane.f32.xlu0 %v937
  %v939 = vpop.xlane.xlu0 %938
  %v940 = vmax.f32 %v863, %v865
  %941 = vmax.xlane.f32.xlu0 %v940
  %v942 = vpop.xlane.xlu0 %941
  %v943 = vmax.f32 %v869, %v871
  %944 = vmax.xlane.f32.xlu0 %v943
  %v945 = vpop.xlane.xlu0 %944
  %v946 = vmax.f32 %v873, %v875
  %947 = vmax.xlane.f32.xlu0 %v946
  %v948 = vpop.xlane.xlu0 %947
  %v949 = vmax.f32 %v879, %v881
  %950 = vmax.xlane.f32.xlu0 %v949
  %v951 = vpop.xlane.xlu0 %950
  %v952 = vmax.f32 %v883, %v885
  %953 = vmax.xlane.f32.xlu0 %v952
  %v954 = vpop.xlane.xlu0 %953
  %v955 = vmax.f32 %v889, %v891
  %956 = vmax.xlane.f32.xlu0 %v955
  %v957 = vpop.xlane.xlu0 %956
  %v958 = vmax.f32 %v893, %v895
  %959 = vmax.xlane.f32.xlu0 %v958
  %v960 = vpop.xlane.xlu0 %959
  %v961 = vmax.f32 %v899, %v901
  %962 = vmax.xlane.f32.xlu0 %v961
  %v963 = vpop.xlane.xlu0 %962
  %v964 = vmax.f32 %v903, %v905
  %965 = vmax.xlane.f32.xlu0 %v964
  %v966 = vpop.xlane.xlu0 %965
  %v967 = vmax.f32 %v909, %v911
  %968 = vmax.xlane.f32.xlu0 %v967
  %v969 = vpop.xlane.xlu0 %968
  %v970 = vmax.f32 %v913, %v915
  %971 = vmax.xlane.f32.xlu0 %v970
  %v972 = vpop.xlane.xlu0 %971
  %v973 = vmax.f32 %v919, %v921
  %974 = vmax.xlane.f32.xlu0 %v973
  %v975 = vpop.xlane.xlu0 %974
  %v976 = vmax.f32 %v923, %v925
  %977 = vmax.xlane.f32.xlu0 %v976
  %v978 = vpop.xlane.xlu0 %977
  %v979 = vmax.f32 %v929, %v931
  %980 = vmax.xlane.f32.xlu0 %v979
  %v981 = vpop.xlane.xlu0 %980
  %v982 = vmax.f32 %v933, %v935
  %983 = vmax.xlane.f32.xlu0 %v982
  %v984 = vpop.xlane.xlu0 %983
  %v985 = vsub.f32 %v859, %v939
  %v986 = vsub.f32 %v861, %v939
  %v987 = vsub.f32 %v863, %v942
  %v988 = vsub.f32 %v865, %v942
  %v989 = vsub.f32 %v869, %v945
  %v990 = vsub.f32 %v871, %v945
  %v991 = vsub.f32 %v873, %v948
  %v992 = vsub.f32 %v875, %v948
  %v993 = vsub.f32 %v879, %v951
  %v994 = vsub.f32 %v881, %v951
  %v995 = vsub.f32 %v883, %v954
  %v996 = vsub.f32 %v885, %v954
  %v997 = vsub.f32 %v889, %v957
  %v998 = vsub.f32 %v891, %v957
  %v999 = vsub.f32 %v893, %v960
  %v1000 = vsub.f32 %v895, %v960
  %v1001 = vsub.f32 %v899, %v963
  %v1002 = vsub.f32 %v901, %v963
  %v1003 = vsub.f32 %v903, %v966
  %v1004 = vsub.f32 %v905, %v966
  %v1005 = vsub.f32 %v909, %v969
  %v1006 = vsub.f32 %v911, %v969
  %v1007 = vsub.f32 %v913, %v972
  %v1008 = vsub.f32 %v915, %v972
  %v1009 = vsub.f32 %v919, %v975
  %v1010 = vsub.f32 %v921, %v975
  %v1011 = vsub.f32 %v923, %v978
  %v1012 = vsub.f32 %v925, %v978
  %v1013 = vsub.f32 %v929, %v981
  %v1014 = vsub.f32 %v931, %v981
  %v1015 = vsub.f32 %v933, %v984
  %v1016 = vsub.f32 %v935, %v984
  %v1017 = vmul.f32 %v985, 1.442695
  %v1018 = vpow.pop %v1017
  %v1019 = vmul.f32 %v986, 1.442695
  %v1020 = vpow.pop %v1019
  %v1021 = vmul.f32 %v987, 1.442695
  %v1022 = vpow.pop %v1021
  %v1023 = vmul.f32 %v988, 1.442695
  %v1024 = vpow.pop %v1023
  %v1025 = vmul.f32 %v989, 1.442695
  %v1026 = vpow.pop %v1025
  %v1027 = vmul.f32 %v990, 1.442695
  %v1028 = vpow.pop %v1027
  %v1029 = vmul.f32 %v991, 1.442695
  %v1030 = vpow.pop %v1029
  %v1031 = vmul.f32 %v992, 1.442695
  %v1032 = vpow.pop %v1031
  %v1033 = vmul.f32 %v993, 1.442695
  %v1034 = vpow.pop %v1033
  %v1035 = vmul.f32 %v994, 1.442695
  %v1036 = vpow.pop %v1035
  %v1037 = vmul.f32 %v995, 1.442695
  %v1038 = vpow.pop %v1037
  %v1039 = vmul.f32 %v996, 1.442695
  %v1040 = vpow.pop %v1039
  %v1041 = vmul.f32 %v997, 1.442695
  %v1042 = vpow.pop %v1041
  %v1043 = vmul.f32 %v998, 1.442695
  %v1044 = vpow.pop %v1043
  %v1045 = vmul.f32 %v999, 1.442695
  %v1046 = vpow.pop %v1045
  %v1047 = vmul.f32 %v1000, 1.442695
  %v1048 = vpow.pop %v1047
  %v1049 = vmul.f32 %v1001, 1.442695
  %v1050 = vpow.pop %v1049
  %v1051 = vmul.f32 %v1002, 1.442695
  %v1052 = vpow.pop %v1051
  %v1053 = vmul.f32 %v1003, 1.442695
  %v1054 = vpow.pop %v1053
  %v1055 = vmul.f32 %v1004, 1.442695
  %v1056 = vpow.pop %v1055
  %v1057 = vmul.f32 %v1005, 1.442695
  %v1058 = vpow.pop %v1057
  %v1059 = vmul.f32 %v1006, 1.442695
  %v1060 = vpow.pop %v1059
  %v1061 = vmul.f32 %v1007, 1.442695
  %v1062 = vpow.pop %v1061
  %v1063 = vmul.f32 %v1008, 1.442695
  %v1064 = vpow.pop %v1063
  %v1065 = vmul.f32 %v1009, 1.442695
  %v1066 = vpow.pop %v1065
  %v1067 = vmul.f32 %v1010, 1.442695
  %v1068 = vpow.pop %v1067
  %v1069 = vmul.f32 %v1011, 1.442695
  %v1070 = vpow.pop %v1069
  %v1071 = vmul.f32 %v1012, 1.442695
  %v1072 = vpow.pop %v1071
  %v1073 = vmul.f32 %v1013, 1.442695
  %v1074 = vpow.pop %v1073
  %v1075 = vmul.f32 %v1014, 1.442695
  %v1076 = vpow.pop %v1075
  %v1077 = vmul.f32 %v1015, 1.442695
  %v1078 = vpow.pop %v1077
  %v1079 = vmul.f32 %v1016, 1.442695
  %v1080 = vpow.pop %v1079
  %v1081 = vpack.c.bf16 %v1022, %v1018
  %v1082 = vpack.c.bf16 %v1024, %v1020
  %v1083 = vpack.c.bf16 %v1030, %v1026
  %v1084 = vpack.c.bf16 %v1032, %v1028
  %v1085 = vpack.c.bf16 %v1038, %v1034
  %v1086 = vpack.c.bf16 %v1040, %v1036
  %v1087 = vpack.c.bf16 %v1046, %v1042
  %v1088 = vpack.c.bf16 %v1048, %v1044
  %v1089 = vpack.c.bf16 %v1054, %v1050
  %v1090 = vpack.c.bf16 %v1056, %v1052
  %v1091 = vpack.c.bf16 %v1062, %v1058
  %v1092 = vpack.c.bf16 %v1064, %v1060
  %v1093 = vpack.c.bf16 %v1070, %v1066
  %v1094 = vpack.c.bf16 %v1072, %v1068
  %v1095 = vpack.c.bf16 %v1078, %v1074
  %v1096 = vpack.c.bf16 %v1080, %v1076
  %1097 = vmatprep.subr.bf16.mxu0 %v1082
  %1098 = vmatpush1.bf16.xpose.msra.mxu0 %v1081
  %1099 = vmatprep.subr.bf16.mxu0 %v1084
  %1100 = vmatpush1.bf16.xpose.msra.mxu0 %v1083
  %1101 = vmatprep.subr.bf16.mxu0 %v1086
  %1102 = vmatpush1.bf16.xpose.msra.mxu0 %v1085
  %1103 = vmatprep.subr.bf16.mxu0 %v1088
  %1104 = vmatpush1.bf16.xpose.msra.mxu0 %v1087
  %1105 = vmatprep.subr.bf16.mxu0 %v1090
  %1106 = vmatpush1.bf16.xpose.msra.mxu0 %v1089
  %1107 = vmatprep.subr.bf16.mxu0 %v1092
  %1108 = vmatpush1.bf16.xpose.msra.mxu0 %v1091
  %1109 = vmatprep.subr.bf16.mxu0 %v1094
  %1110 = vmatpush1.bf16.xpose.msra.mxu0 %v1093
  %1111 = vmatprep.subr.bf16.mxu0 %v1096
  %1112 = vmatpush1.bf16.xpose.msra.mxu0 %v1095
  %1113 = vmatprep.subr.bf16.mxu0 0
  %1114 = vmatpush1.bf16.xpose.msra.mxu0 0
  %1115 = vmatprep.subr.bf16.mxu0 0
  %1116 = vmatpush1.bf16.xpose.msra.mxu0 0
  %1117 = vmatprep.subr.bf16.mxu0 0
  %1118 = vmatpush1.bf16.xpose.msra.mxu0 0
  %1119 = vmatprep.subr.bf16.mxu0 0
  %1120 = vmatpush1.bf16.xpose.msra.mxu0 0
  %1121 = vmatprep.subr.bf16.mxu0 0
  %1122 = vmatpush1.bf16.xpose.msra.mxu0 0
  %1123 = vmatprep.subr.bf16.mxu0 0
  %1124 = vmatpush1.bf16.xpose.msra.mxu0 0
  %1125 = vmatprep.subr.bf16.mxu0 0
  %1126 = vmatpush1.bf16.xpose.msra.mxu0 0
  %1127 = vmatprep.subr.bf16.mxu0 0
  %1128 = vmatpush1.bf16.xpose.msra.mxu0 0
  %1129 = vmatprep.mubr.bf16.mxu0 %v410
  %1130 = vmatmul.mubr.bf16.gmra.mrb[0].mxu0 %v409
  %v1131 = vpop.f32.mrb[0].mxu0
  %v1132 = vadd.f32 0.0, %v1131
  %v1133 = vpop.f32.mrb[0].mxu0
  %v1134 = vpop.f32.mrb[0].mxu0
  %v1135 = vadd.f32 0.0, %v1134
  %v1136 = vpop.f32.mrb[0].mxu0
  %1137 = vdwg.mxu0
  %v1138 = vrcp.pop %v1135
  %v1139 = vmul.f32 1.0, %v1138
  %v1140 = vlaneseq
  %v1141 = vshrl.u32 %v1140, 7
  %v1142 = vsub.s32 0, %v1141
  %v1143 = vrot.slane %v1139, %v1142
  %v1144 = vmul.f32 %v1132, %v1143
  %v1145 = vadd.f32 %v1144, %v197
  %1146 = vst [vmem:[%s2 + $0x8] sm:$0xff] %v1145
  %v1147 = vpack.c.bf16 %v391, %v391
  %v1148 = vpack.c.bf16 %v393, %v393
  %v1149 = vpack.c.bf16 %v403, %v397
  %v1150 = vpack.c.bf16 %v405, %v399
  %v1151 = vpack.c.bf16 %v385, %v385
  %1152 = vxpose.xlu0.c.b16.start [1/8] %v1151, 128
  %1153 = vxpose.xlu0.c.b16.cont [2/8] 0, 128
  %1154 = vxpose.xlu0.c.b16.cont [3/8] 0, 128
  %1155 = vxpose.xlu0.c.b16.cont [4/8] 0, 128
  %1156 = vxpose.xlu0.c.b16.cont [5/8] 0, 128
  %1157 = vxpose.xlu0.c.b16.cont [6/8] 0, 128
  %1158 = vxpose.xlu0.c.b16.cont [7/8] 0, 128
  %1159 = vxpose.xlu0.c.b16.end [8/8] 0, 128
  %v1160 = vpop.trf.xlu0
  %v1161 = vpop.trf.xlu0
  %v1162 = vpop.trf.xlu0
  %v1163 = vpop.trf.xlu0
  %v1164 = vpop.trf.xlu0
  %v1165 = vpop.trf.xlu0
  %v1166 = vpop.trf.xlu0
  %v1167 = vpop.trf.xlu0
  %v1169 = vsel %vm428, %v1160, 0
  %v1172 = vsel %vm428, %v1161, 0
  %v1175 = vsel %vm428, %v1162, 0
  %v1178 = vsel %vm428, %v1163, 0
  %v1181 = vsel %vm428, %v1164, 0
  %v1184 = vsel %vm428, %v1165, 0
  %v1187 = vsel %vm428, %v1166, 0
  %v1190 = vsel %vm428, %v1167, 0
  %v1193 = vsel %vm453, %v1147, 0
  %v1196 = vsel %vm453, %v1148, 0
  %1198 = vmatprep.subr.bf16.mxu0 %v1196
  %1199 = vmatpush1.bf16.msra.mxu0 %v1193
  %1200 = vmatprep.subr.bf16.mxu0 0
  %1201 = vmatpush1.bf16.msra.mxu0 0
  %1202 = vmatprep.subr.bf16.mxu0 0
  %1203 = vmatpush1.bf16.msra.mxu0 0
  %1204 = vmatprep.subr.bf16.mxu0 0
  %1205 = vmatpush1.bf16.msra.mxu0 0
  %1206 = vmatprep.subr.bf16.mxu0 0
  %1207 = vmatpush1.bf16.msra.mxu0 0
  %1208 = vmatprep.subr.bf16.mxu0 0
  %1209 = vmatpush1.bf16.msra.mxu0 0
  %1210 = vmatprep.subr.bf16.mxu0 0
  %1211 = vmatpush1.bf16.msra.mxu0 0
  %1212 = vmatprep.subr.bf16.mxu0 0
  %1213 = vmatpush1.bf16.msra.mxu0 0
  %1214 = vmatprep.subr.bf16.mxu0 0
  %1215 = vmatpush1.bf16.msra.mxu0 0
  %1216 = vmatprep.subr.bf16.mxu0 0
  %1217 = vmatpush1.bf16.msra.mxu0 0
  %1218 = vmatprep.subr.bf16.mxu0 0
  %1219 = vmatpush1.bf16.msra.mxu0 0
  %1220 = vmatprep.subr.bf16.mxu0 0
  %1221 = vmatpush1.bf16.msra.mxu0 0
  %1222 = vmatprep.subr.bf16.mxu0 0
  %1223 = vmatpush1.bf16.msra.mxu0 0
  %1224 = vmatprep.subr.bf16.mxu0 0
  %1225 = vmatpush1.bf16.msra.mxu0 0
  %1226 = vmatprep.subr.bf16.mxu0 0
  %1227 = vmatpush1.bf16.msra.mxu0 0
  %1228 = vmatprep.subr.bf16.mxu0 0
  %1229 = vmatpush1.bf16.msra.mxu0 0
  %1230 = vmatprep.mubr.bf16.mxu0 0
  %1231 = vmatmul.mubr.bf16.gmra.mrb[0].mxu0 %v1169
  %v1232 = vpop.f32.mrb[0].mxu0
  %v1233 = vadd.f32 0.0, %v1232
  %v1234 = vpop.f32.mrb[0].mxu0
  %v1235 = vadd.f32 0.0, %v1234
  %v1236 = vpop.f32.mrb[0].mxu0
  %v1237 = vadd.f32 0.0, %v1236
  %v1238 = vpop.f32.mrb[0].mxu0
  %v1239 = vadd.f32 0.0, %v1238
  %1240 = vmatprep.mubr.bf16.mxu0 0
  %1241 = vmatmul.mubr.bf16.gmra.mrb[0].mxu0 %v1172
  %v1242 = vpop.f32.mrb[0].mxu0
  %v1243 = vadd.f32 0.0, %v1242
  %v1244 = vpop.f32.mrb[0].mxu0
  %v1245 = vadd.f32 0.0, %v1244
  %v1246 = vpop.f32.mrb[0].mxu0
  %v1247 = vadd.f32 0.0, %v1246
  %v1248 = vpop.f32.mrb[0].mxu0
  %v1249 = vadd.f32 0.0, %v1248
  %1250 = vmatprep.mubr.bf16.mxu0 0
  %1251 = vmatmul.mubr.bf16.gmra.mrb[0].mxu0 %v1175
  %v1252 = vpop.f32.mrb[0].mxu0
  %v1253 = vadd.f32 0.0, %v1252
  %v1254 = vpop.f32.mrb[0].mxu0
  %v1255 = vadd.f32 0.0, %v1254
  %v1256 = vpop.f32.mrb[0].mxu0
  %v1257 = vadd.f32 0.0, %v1256
  %v1258 = vpop.f32.mrb[0].mxu0
  %v1259 = vadd.f32 0.0, %v1258
  %1260 = vmatprep.mubr.bf16.mxu0 0
  %1261 = vmatmul.mubr.bf16.gmra.mrb[0].mxu0 %v1178
  %v1262 = vpop.f32.mrb[0].mxu0
  %v1263 = vadd.f32 0.0, %v1262
  %v1264 = vpop.f32.mrb[0].mxu0
  %v1265 = vadd.f32 0.0, %v1264
  %v1266 = vpop.f32.mrb[0].mxu0
  %v1267 = vadd.f32 0.0, %v1266
  %v1268 = vpop.f32.mrb[0].mxu0
  %v1269 = vadd.f32 0.0, %v1268
  %1270 = vmatprep.mubr.bf16.mxu0 0
  %1271 = vmatmul.mubr.bf16.gmra.mrb[0].mxu0 %v1181
  %v1272 = vpop.f32.mrb[0].mxu0
  %v1273 = vadd.f32 0.0, %v1272
  %v1274 = vpop.f32.mrb[0].mxu0
  %v1275 = vadd.f32 0.0, %v1274
  %v1276 = vpop.f32.mrb[0].mxu0
  %v1277 = vadd.f32 0.0, %v1276
  %v1278 = vpop.f32.mrb[0].mxu0
  %v1279 = vadd.f32 0.0, %v1278
  %1280 = vmatprep.mubr.bf16.mxu0 0
  %1281 = vmatmul.mubr.bf16.gmra.mrb[0].mxu0 %v1184
  %v1282 = vpop.f32.mrb[0].mxu0
  %v1283 = vadd.f32 0.0, %v1282
  %v1284 = vpop.f32.mrb[0].mxu0
  %v1285 = vadd.f32 0.0, %v1284
  %v1286 = vpop.f32.mrb[0].mxu0
  %v1287 = vadd.f32 0.0, %v1286
  %v1288 = vpop.f32.mrb[0].mxu0
  %v1289 = vadd.f32 0.0, %v1288
  %1290 = vmatprep.mubr.bf16.mxu0 0
  %1291 = vmatmul.mubr.bf16.gmra.mrb[0].mxu0 %v1187
  %v1292 = vpop.f32.mrb[0].mxu0
  %v1293 = vadd.f32 0.0, %v1292
  %v1294 = vpop.f32.mrb[0].mxu0
  %v1295 = vadd.f32 0.0, %v1294
  %v1296 = vpop.f32.mrb[0].mxu0
  %v1297 = vadd.f32 0.0, %v1296
  %v1298 = vpop.f32.mrb[0].mxu0
  %v1299 = vadd.f32 0.0, %v1298
  %1300 = vmatprep.mubr.bf16.mxu0 0
  %1301 = vmatmul.mubr.bf16.gmra.mrb[0].mxu0 %v1190
  %v1302 = vpop.f32.mrb[0].mxu0
  %v1303 = vadd.f32 0.0, %v1302
  %v1304 = vpop.f32.mrb[0].mxu0
  %v1305 = vadd.f32 0.0, %v1304
  %v1306 = vpop.f32.mrb[0].mxu0
  %v1307 = vadd.f32 0.0, %v1306
  %v1308 = vpop.f32.mrb[0].mxu0
  %v1309 = vadd.f32 0.0, %v1308
  %1310 = vdwg.mxu0
  %v1311 = vmax.f32 %v1233, %v1235
  %1312 = vmax.xlane.f32.xlu0 %v1311
  %v1313 = vpop.xlane.xlu0 %1312
  %v1314 = vmax.f32 %v1237, %v1239
  %1315 = vmax.xlane.f32.xlu0 %v1314
  %v1316 = vpop.xlane.xlu0 %1315
  %v1317 = vmax.f32 %v1243, %v1245
  %1318 = vmax.xlane.f32.xlu0 %v1317
  %v1319 = vpop.xlane.xlu0 %1318
  %v1320 = vmax.f32 %v1247, %v1249
  %1321 = vmax.xlane.f32.xlu0 %v1320
  %v1322 = vpop.xlane.xlu0 %1321
  %v1323 = vmax.f32 %v1253, %v1255
  %1324 = vmax.xlane.f32.xlu0 %v1323
  %v1325 = vpop.xlane.xlu0 %1324
  %v1326 = vmax.f32 %v1257, %v1259
  %1327 = vmax.xlane.f32.xlu0 %v1326
  %v1328 = vpop.xlane.xlu0 %1327
  %v1329 = vmax.f32 %v1263, %v1265
  %1330 = vmax.xlane.f32.xlu0 %v1329
  %v1331 = vpop.xlane.xlu0 %1330
  %v1332 = vmax.f32 %v1267, %v1269
  %1333 = vmax.xlane.f32.xlu0 %v1332
  %v1334 = vpop.xlane.xlu0 %1333
  %v1335 = vmax.f32 %v1273, %v1275
  %1336 = vmax.xlane.f32.xlu0 %v1335
  %v1337 = vpop.xlane.xlu0 %1336
  %v1338 = vmax.f32 %v1277, %v1279
  %1339 = vmax.xlane.f32.xlu0 %v1338
  %v1340 = vpop.xlane.xlu0 %1339
  %v1341 = vmax.f32 %v1283, %v1285
  %1342 = vmax.xlane.f32.xlu0 %v1341
  %v1343 = vpop.xlane.xlu0 %1342
  %v1344 = vmax.f32 %v1287, %v1289
  %1345 = vmax.xlane.f32.xlu0 %v1344
  %v1346 = vpop.xlane.xlu0 %1345
  %v1347 = vmax.f32 %v1293, %v1295
  %1348 = vmax.xlane.f32.xlu0 %v1347
  %v1349 = vpop.xlane.xlu0 %1348
  %v1350 = vmax.f32 %v1297, %v1299
  %1351 = vmax.xlane.f32.xlu0 %v1350
  %v1352 = vpop.xlane.xlu0 %1351
  %v1353 = vmax.f32 %v1303, %v1305
  %1354 = vmax.xlane.f32.xlu0 %v1353
  %v1355 = vpop.xlane.xlu0 %1354
  %v1356 = vmax.f32 %v1307, %v1309
  %1357 = vmax.xlane.f32.xlu0 %v1356
  %v1358 = vpop.xlane.xlu0 %1357
  %v1359 = vsub.f32 %v1233, %v1313
  %v1360 = vsub.f32 %v1235, %v1313
  %v1361 = vsub.f32 %v1237, %v1316
  %v1362 = vsub.f32 %v1239, %v1316
  %v1363 = vsub.f32 %v1243, %v1319
  %v1364 = vsub.f32 %v1245, %v1319
  %v1365 = vsub.f32 %v1247, %v1322
  %v1366 = vsub.f32 %v1249, %v1322
  %v1367 = vsub.f32 %v1253, %v1325
  %v1368 = vsub.f32 %v1255, %v1325
  %v1369 = vsub.f32 %v1257, %v1328
  %v1370 = vsub.f32 %v1259, %v1328
  %v1371 = vsub.f32 %v1263, %v1331
  %v1372 = vsub.f32 %v1265, %v1331
  %v1373 = vsub.f32 %v1267, %v1334
  %v1374 = vsub.f32 %v1269, %v1334
  %v1375 = vsub.f32 %v1273, %v1337
  %v1376 = vsub.f32 %v1275, %v1337
  %v1377 = vsub.f32 %v1277, %v1340
  %v1378 = vsub.f32 %v1279, %v1340
  %v1379 = vsub.f32 %v1283, %v1343
  %v1380 = vsub.f32 %v1285, %v1343
  %v1381 = vsub.f32 %v1287, %v1346
  %v1382 = vsub.f32 %v1289, %v1346
  %v1383 = vsub.f32 %v1293, %v1349
  %v1384 = vsub.f32 %v1295, %v1349
  %v1385 = vsub.f32 %v1297, %v1352
  %v1386 = vsub.f32 %v1299, %v1352
  %v1387 = vsub.f32 %v1303, %v1355
  %v1388 = vsub.f32 %v1305, %v1355
  %v1389 = vsub.f32 %v1307, %v1358
  %v1390 = vsub.f32 %v1309, %v1358
  %v1391 = vmul.f32 %v1359, 1.442695
  %v1392 = vpow.pop %v1391
  %v1393 = vmul.f32 %v1360, 1.442695
  %v1394 = vpow.pop %v1393
  %v1395 = vmul.f32 %v1361, 1.442695
  %v1396 = vpow.pop %v1395
  %v1397 = vmul.f32 %v1362, 1.442695
  %v1398 = vpow.pop %v1397
  %v1399 = vmul.f32 %v1363, 1.442695
  %v1400 = vpow.pop %v1399
  %v1401 = vmul.f32 %v1364, 1.442695
  %v1402 = vpow.pop %v1401
  %v1403 = vmul.f32 %v1365, 1.442695
  %v1404 = vpow.pop %v1403
  %v1405 = vmul.f32 %v1366, 1.442695
  %v1406 = vpow.pop %v1405
  %v1407 = vmul.f32 %v1367, 1.442695
  %v1408 = vpow.pop %v1407
  %v1409 = vmul.f32 %v1368, 1.442695
  %v1410 = vpow.pop %v1409
  %v1411 = vmul.f32 %v1369, 1.442695
  %v1412 = vpow.pop %v1411
  %v1413 = vmul.f32 %v1370, 1.442695
  %v1414 = vpow.pop %v1413
  %v1415 = vmul.f32 %v1371, 1.442695
  %v1416 = vpow.pop %v1415
  %v1417 = vmul.f32 %v1372, 1.442695
  %v1418 = vpow.pop %v1417
  %v1419 = vmul.f32 %v1373, 1.442695
  %v1420 = vpow.pop %v1419
  %v1421 = vmul.f32 %v1374, 1.442695
  %v1422 = vpow.pop %v1421
  %v1423 = vmul.f32 %v1375, 1.442695
  %v1424 = vpow.pop %v1423
  %v1425 = vmul.f32 %v1376, 1.442695
  %v1426 = vpow.pop %v1425
  %v1427 = vmul.f32 %v1377, 1.442695
  %v1428 = vpow.pop %v1427
  %v1429 = vmul.f32 %v1378, 1.442695
  %v1430 = vpow.pop %v1429
  %v1431 = vmul.f32 %v1379, 1.442695
  %v1432 = vpow.pop %v1431
  %v1433 = vmul.f32 %v1380, 1.442695
  %v1434 = vpow.pop %v1433
  %v1435 = vmul.f32 %v1381, 1.442695
  %v1436 = vpow.pop %v1435
  %v1437 = vmul.f32 %v1382, 1.442695
  %v1438 = vpow.pop %v1437
  %v1439 = vmul.f32 %v1383, 1.442695
  %v1440 = vpow.pop %v1439
  %v1441 = vmul.f32 %v1384, 1.442695
  %v1442 = vpow.pop %v1441
  %v1443 = vmul.f32 %v1385, 1.442695
  %v1444 = vpow.pop %v1443
  %v1445 = vmul.f32 %v1386, 1.442695
  %v1446 = vpow.pop %v1445
  %v1447 = vmul.f32 %v1387, 1.442695
  %v1448 = vpow.pop %v1447
  %v1449 = vmul.f32 %v1388, 1.442695
  %v1450 = vpow.pop %v1449
  %v1451 = vmul.f32 %v1389, 1.442695
  %v1452 = vpow.pop %v1451
  %v1453 = vmul.f32 %v1390, 1.442695
  %v1454 = vpow.pop %v1453
  %v1455 = vpack.c.bf16 %v1396, %v1392
  %v1456 = vpack.c.bf16 %v1398, %v1394
  %v1457 = vpack.c.bf16 %v1404, %v1400
  %v1458 = vpack.c.bf16 %v1406, %v1402
  %v1459 = vpack.c.bf16 %v1412, %v1408
  %v1460 = vpack.c.bf16 %v1414, %v1410
  %v1461 = vpack.c.bf16 %v1420, %v1416
  %v1462 = vpack.c.bf16 %v1422, %v1418
  %v1463 = vpack.c.bf16 %v1428, %v1424
  %v1464 = vpack.c.bf16 %v1430, %v1426
  %v1465 = vpack.c.bf16 %v1436, %v1432
  %v1466 = vpack.c.bf16 %v1438, %v1434
  %v1467 = vpack.c.bf16 %v1444, %v1440
  %v1468 = vpack.c.bf16 %v1446, %v1442
  %v1469 = vpack.c.bf16 %v1452, %v1448
  %v1470 = vpack.c.bf16 %v1454, %v1450
  %1471 = vmatprep.subr.bf16.mxu0 %v1456
  %1472 = vmatpush1.bf16.xpose.msra.mxu0 %v1455
  %1473 = vmatprep.subr.bf16.mxu0 %v1458
  %1474 = vmatpush1.bf16.xpose.msra.mxu0 %v1457
  %1475 = vmatprep.subr.bf16.mxu0 %v1460
  %1476 = vmatpush1.bf16.xpose.msra.mxu0 %v1459
  %1477 = vmatprep.subr.bf16.mxu0 %v1462
  %1478 = vmatpush1.bf16.xpose.msra.mxu0 %v1461
  %1479 = vmatprep.subr.bf16.mxu0 %v1464
  %1480 = vmatpush1.bf16.xpose.msra.mxu0 %v1463
  %1481 = vmatprep.subr.bf16.mxu0 %v1466
  %1482 = vmatpush1.bf16.xpose.msra.mxu0 %v1465
  %1483 = vmatprep.subr.bf16.mxu0 %v1468
  %1484 = vmatpush1.bf16.xpose.msra.mxu0 %v1467
  %1485 = vmatprep.subr.bf16.mxu0 %v1470
  %1486 = vmatpush1.bf16.xpose.msra.mxu0 %v1469
  %1487 = vmatprep.subr.bf16.mxu0 0
  %1488 = vmatpush1.bf16.xpose.msra.mxu0 0
  %1489 = vmatprep.subr.bf16.mxu0 0
  %1490 = vmatpush1.bf16.xpose.msra.mxu0 0
  %1491 = vmatprep.subr.bf16.mxu0 0
  %1492 = vmatpush1.bf16.xpose.msra.mxu0 0
  %1493 = vmatprep.subr.bf16.mxu0 0
  %1494 = vmatpush1.bf16.xpose.msra.mxu0 0
  %1495 = vmatprep.subr.bf16.mxu0 0
  %1496 = vmatpush1.bf16.xpose.msra.mxu0 0
  %1497 = vmatprep.subr.bf16.mxu0 0
  %1498 = vmatpush1.bf16.xpose.msra.mxu0 0
  %1499 = vmatprep.subr.bf16.mxu0 0
  %1500 = vmatpush1.bf16.xpose.msra.mxu0 0
  %1501 = vmatprep.subr.bf16.mxu0 0
  %1502 = vmatpush1.bf16.xpose.msra.mxu0 0
  %1503 = vmatprep.mubr.bf16.mxu0 %v1150
  %1504 = vmatmul.mubr.bf16.gmra.mrb[0].mxu0 %v1149
  %v1505 = vpop.f32.mrb[0].mxu0
  %v1506 = vadd.f32 0.0, %v1505
  %v1507 = vpop.f32.mrb[0].mxu0
  %v1508 = vpop.f32.mrb[0].mxu0
  %v1509 = vadd.f32 0.0, %v1508
  %v1510 = vpop.f32.mrb[0].mxu0
  %1511 = vdwg.mxu0
  %v1512 = vrcp.pop %v1509
  %v1513 = vmul.f32 1.0, %v1512
  %v1514 = vlaneseq
  %v1515 = vshrl.u32 %v1514, 7
  %v1516 = vsub.s32 0, %v1515
  %v1517 = vrot.slane %v1513, %v1516
  %v1518 = vmul.f32 %v1506, %v1517
  %v1519 = vadd.f32 %v1518, %v198
  %s1520 = scalar_lea.vmem %s2, 16
  %1521 = vst [vmem:[%s1520] sm:$0xff] %v1519
  %v1522 = vpack.c.bf16 %v387, %v387
  %1523 = vxpose.xlu0.c.b16.start [1/8] %v1522, 128
  %1524 = vxpose.xlu0.c.b16.cont [2/8] 0, 128
  %1525 = vxpose.xlu0.c.b16.cont [3/8] 0, 128
  %1526 = vxpose.xlu0.c.b16.cont [4/8] 0, 128
  %1527 = vxpose.xlu0.c.b16.cont [5/8] 0, 128
  %1528 = vxpose.xlu0.c.b16.cont [6/8] 0, 128
  %1529 = vxpose.xlu0.c.b16.cont [7/8] 0, 128
  %1530 = vxpose.xlu0.c.b16.end [8/8] 0, 128
  %v1531 = vpop.trf.xlu0
  %v1532 = vpop.trf.xlu0
  %v1533 = vpop.trf.xlu0
  %v1534 = vpop.trf.xlu0
  %v1535 = vpop.trf.xlu0
  %v1536 = vpop.trf.xlu0
  %v1537 = vpop.trf.xlu0
  %v1538 = vpop.trf.xlu0
  %v1540 = vsel %vm428, %v1531, 0
  %v1543 = vsel %vm428, %v1532, 0
  %v1546 = vsel %vm428, %v1533, 0
  %v1549 = vsel %vm428, %v1534, 0
  %v1552 = vsel %vm428, %v1535, 0
  %v1555 = vsel %vm428, %v1536, 0
  %v1558 = vsel %vm428, %v1537, 0
  %v1561 = vsel %vm428, %v1538, 0
  %1563 = vmatprep.subr.bf16.mxu0 %v1196
  %1564 = vmatpush1.bf16.msra.mxu0 %v1193
  %1565 = vmatprep.subr.bf16.mxu0 0
  %1566 = vmatpush1.bf16.msra.mxu0 0
  %1567 = vmatprep.subr.bf16.mxu0 0
  %1568 = vmatpush1.bf16.msra.mxu0 0
  %1569 = vmatprep.subr.bf16.mxu0 0
  %1570 = vmatpush1.bf16.msra.mxu0 0
  %1571 = vmatprep.subr.bf16.mxu0 0
  %1572 = vmatpush1.bf16.msra.mxu0 0
  %1573 = vmatprep.subr.bf16.mxu0 0
  %1574 = vmatpush1.bf16.msra.mxu0 0
  %1575 = vmatprep.subr.bf16.mxu0 0
  %1576 = vmatpush1.bf16.msra.mxu0 0
  %1577 = vmatprep.subr.bf16.mxu0 0
  %1578 = vmatpush1.bf16.msra.mxu0 0
  %1579 = vmatprep.subr.bf16.mxu0 0
  %1580 = vmatpush1.bf16.msra.mxu0 0
  %1581 = vmatprep.subr.bf16.mxu0 0
  %1582 = vmatpush1.bf16.msra.mxu0 0
  %1583 = vmatprep.subr.bf16.mxu0 0
  %1584 = vmatpush1.bf16.msra.mxu0 0
  %1585 = vmatprep.subr.bf16.mxu0 0
  %1586 = vmatpush1.bf16.msra.mxu0 0
  %1587 = vmatprep.subr.bf16.mxu0 0
  %1588 = vmatpush1.bf16.msra.mxu0 0
  %1589 = vmatprep.subr.bf16.mxu0 0
  %1590 = vmatpush1.bf16.msra.mxu0 0
  %1591 = vmatprep.subr.bf16.mxu0 0
  %1592 = vmatpush1.bf16.msra.mxu0 0
  %1593 = vmatprep.subr.bf16.mxu0 0
  %1594 = vmatpush1.bf16.msra.mxu0 0
  %1595 = vmatprep.mubr.bf16.mxu0 0
  %1596 = vmatmul.mubr.bf16.gmra.mrb[0].mxu0 %v1540
  %v1597 = vpop.f32.mrb[0].mxu0
  %v1598 = vadd.f32 0.0, %v1597
  %v1599 = vpop.f32.mrb[0].mxu0
  %v1600 = vadd.f32 0.0, %v1599
  %v1601 = vpop.f32.mrb[0].mxu0
  %v1602 = vadd.f32 0.0, %v1601
  %v1603 = vpop.f32.mrb[0].mxu0
  %v1604 = vadd.f32 0.0, %v1603
  %1605 = vmatprep.mubr.bf16.mxu0 0
  %1606 = vmatmul.mubr.bf16.gmra.mrb[0].mxu0 %v1543
  %v1607 = vpop.f32.mrb[0].mxu0
  %v1608 = vadd.f32 0.0, %v1607
  %v1609 = vpop.f32.mrb[0].mxu0
  %v1610 = vadd.f32 0.0, %v1609
  %v1611 = vpop.f32.mrb[0].mxu0
  %v1612 = vadd.f32 0.0, %v1611
  %v1613 = vpop.f32.mrb[0].mxu0
  %v1614 = vadd.f32 0.0, %v1613
  %1615 = vmatprep.mubr.bf16.mxu0 0
  %1616 = vmatmul.mubr.bf16.gmra.mrb[0].mxu0 %v1546
  %v1617 = vpop.f32.mrb[0].mxu0
  %v1618 = vadd.f32 0.0, %v1617
  %v1619 = vpop.f32.mrb[0].mxu0
  %v1620 = vadd.f32 0.0, %v1619
  %v1621 = vpop.f32.mrb[0].mxu0
  %v1622 = vadd.f32 0.0, %v1621
  %v1623 = vpop.f32.mrb[0].mxu0
  %v1624 = vadd.f32 0.0, %v1623
  %1625 = vmatprep.mubr.bf16.mxu0 0
  %1626 = vmatmul.mubr.bf16.gmra.mrb[0].mxu0 %v1549
  %v1627 = vpop.f32.mrb[0].mxu0
  %v1628 = vadd.f32 0.0, %v1627
  %v1629 = vpop.f32.mrb[0].mxu0
  %v1630 = vadd.f32 0.0, %v1629
  %v1631 = vpop.f32.mrb[0].mxu0
  %v1632 = vadd.f32 0.0, %v1631
  %v1633 = vpop.f32.mrb[0].mxu0
  %v1634 = vadd.f32 0.0, %v1633
  %1635 = vmatprep.mubr.bf16.mxu0 0
  %1636 = vmatmul.mubr.bf16.gmra.mrb[0].mxu0 %v1552
  %v1637 = vpop.f32.mrb[0].mxu0
  %v1638 = vadd.f32 0.0, %v1637
  %v1639 = vpop.f32.mrb[0].mxu0
  %v1640 = vadd.f32 0.0, %v1639
  %v1641 = vpop.f32.mrb[0].mxu0
  %v1642 = vadd.f32 0.0, %v1641
  %v1643 = vpop.f32.mrb[0].mxu0
  %v1644 = vadd.f32 0.0, %v1643
  %1645 = vmatprep.mubr.bf16.mxu0 0
  %1646 = vmatmul.mubr.bf16.gmra.mrb[0].mxu0 %v1555
  %v1647 = vpop.f32.mrb[0].mxu0
  %v1648 = vadd.f32 0.0, %v1647
  %v1649 = vpop.f32.mrb[0].mxu0
  %v1650 = vadd.f32 0.0, %v1649
  %v1651 = vpop.f32.mrb[0].mxu0
  %v1652 = vadd.f32 0.0, %v1651
  %v1653 = vpop.f32.mrb[0].mxu0
  %v1654 = vadd.f32 0.0, %v1653
  %1655 = vmatprep.mubr.bf16.mxu0 0
  %1656 = vmatmul.mubr.bf16.gmra.mrb[0].mxu0 %v1558
  %v1657 = vpop.f32.mrb[0].mxu0
  %v1658 = vadd.f32 0.0, %v1657
  %v1659 = vpop.f32.mrb[0].mxu0
  %v1660 = vadd.f32 0.0, %v1659
  %v1661 = vpop.f32.mrb[0].mxu0
  %v1662 = vadd.f32 0.0, %v1661
  %v1663 = vpop.f32.mrb[0].mxu0
  %v1664 = vadd.f32 0.0, %v1663
  %1665 = vmatprep.mubr.bf16.mxu0 0
  %1666 = vmatmul.mubr.bf16.gmra.mrb[0].mxu0 %v1561
  %v1667 = vpop.f32.mrb[0].mxu0
  %v1668 = vadd.f32 0.0, %v1667
  %v1669 = vpop.f32.mrb[0].mxu0
  %v1670 = vadd.f32 0.0, %v1669
  %v1671 = vpop.f32.mrb[0].mxu0
  %v1672 = vadd.f32 0.0, %v1671
  %v1673 = vpop.f32.mrb[0].mxu0
  %v1674 = vadd.f32 0.0, %v1673
  %1675 = vdwg.mxu0
  %v1676 = vmax.f32 %v1598, %v1600
  %1677 = vmax.xlane.f32.xlu0 %v1676
  %v1678 = vpop.xlane.xlu0 %1677
  %v1679 = vmax.f32 %v1602, %v1604
  %1680 = vmax.xlane.f32.xlu0 %v1679
  %v1681 = vpop.xlane.xlu0 %1680
  %v1682 = vmax.f32 %v1608, %v1610
  %1683 = vmax.xlane.f32.xlu0 %v1682
  %v1684 = vpop.xlane.xlu0 %1683
  %v1685 = vmax.f32 %v1612, %v1614
  %1686 = vmax.xlane.f32.xlu0 %v1685
  %v1687 = vpop.xlane.xlu0 %1686
  %v1688 = vmax.f32 %v1618, %v1620
  %1689 = vmax.xlane.f32.xlu0 %v1688
  %v1690 = vpop.xlane.xlu0 %1689
  %v1691 = vmax.f32 %v1622, %v1624
  %1692 = vmax.xlane.f32.xlu0 %v1691
  %v1693 = vpop.xlane.xlu0 %1692
  %v1694 = vmax.f32 %v1628, %v1630
  %1695 = vmax.xlane.f32.xlu0 %v1694
  %v1696 = vpop.xlane.xlu0 %1695
  %v1697 = vmax.f32 %v1632, %v1634
  %1698 = vmax.xlane.f32.xlu0 %v1697
  %v1699 = vpop.xlane.xlu0 %1698
  %v1700 = vmax.f32 %v1638, %v1640
  %1701 = vmax.xlane.f32.xlu0 %v1700
  %v1702 = vpop.xlane.xlu0 %1701
  %v1703 = vmax.f32 %v1642, %v1644
  %1704 = vmax.xlane.f32.xlu0 %v1703
  %v1705 = vpop.xlane.xlu0 %1704
  %v1706 = vmax.f32 %v1648, %v1650
  %1707 = vmax.xlane.f32.xlu0 %v1706
  %v1708 = vpop.xlane.xlu0 %1707
  %v1709 = vmax.f32 %v1652, %v1654
  %1710 = vmax.xlane.f32.xlu0 %v1709
  %v1711 = vpop.xlane.xlu0 %1710
  %v1712 = vmax.f32 %v1658, %v1660
  %1713 = vmax.xlane.f32.xlu0 %v1712
  %v1714 = vpop.xlane.xlu0 %1713
  %v1715 = vmax.f32 %v1662, %v1664
  %1716 = vmax.xlane.f32.xlu0 %v1715
  %v1717 = vpop.xlane.xlu0 %1716
  %v1718 = vmax.f32 %v1668, %v1670
  %1719 = vmax.xlane.f32.xlu0 %v1718
  %v1720 = vpop.xlane.xlu0 %1719
  %v1721 = vmax.f32 %v1672, %v1674
  %1722 = vmax.xlane.f32.xlu0 %v1721
  %v1723 = vpop.xlane.xlu0 %1722
  %v1724 = vsub.f32 %v1598, %v1678
  %v1725 = vsub.f32 %v1600, %v1678
  %v1726 = vsub.f32 %v1602, %v1681
  %v1727 = vsub.f32 %v1604, %v1681
  %v1728 = vsub.f32 %v1608, %v1684
  %v1729 = vsub.f32 %v1610, %v1684
  %v1730 = vsub.f32 %v1612, %v1687
  %v1731 = vsub.f32 %v1614, %v1687
  %v1732 = vsub.f32 %v1618, %v1690
  %v1733 = vsub.f32 %v1620, %v1690
  %v1734 = vsub.f32 %v1622, %v1693
  %v1735 = vsub.f32 %v1624, %v1693
  %v1736 = vsub.f32 %v1628, %v1696
  %v1737 = vsub.f32 %v1630, %v1696
  %v1738 = vsub.f32 %v1632, %v1699
  %v1739 = vsub.f32 %v1634, %v1699
  %v1740 = vsub.f32 %v1638, %v1702
  %v1741 = vsub.f32 %v1640, %v1702
  %v1742 = vsub.f32 %v1642, %v1705
  %v1743 = vsub.f32 %v1644, %v1705
  %v1744 = vsub.f32 %v1648, %v1708
  %v1745 = vsub.f32 %v1650, %v1708
  %v1746 = vsub.f32 %v1652, %v1711
  %v1747 = vsub.f32 %v1654, %v1711
  %v1748 = vsub.f32 %v1658, %v1714
  %v1749 = vsub.f32 %v1660, %v1714
  %v1750 = vsub.f32 %v1662, %v1717
  %v1751 = vsub.f32 %v1664, %v1717
  %v1752 = vsub.f32 %v1668, %v1720
  %v1753 = vsub.f32 %v1670, %v1720
  %v1754 = vsub.f32 %v1672, %v1723
  %v1755 = vsub.f32 %v1674, %v1723
  %v1756 = vmul.f32 %v1724, 1.442695
  %v1757 = vpow.pop %v1756
  %v1758 = vmul.f32 %v1725, 1.442695
  %v1759 = vpow.pop %v1758
  %v1760 = vmul.f32 %v1726, 1.442695
  %v1761 = vpow.pop %v1760
  %v1762 = vmul.f32 %v1727, 1.442695
  %v1763 = vpow.pop %v1762
  %v1764 = vmul.f32 %v1728, 1.442695
  %v1765 = vpow.pop %v1764
  %v1766 = vmul.f32 %v1729, 1.442695
  %v1767 = vpow.pop %v1766
  %v1768 = vmul.f32 %v1730, 1.442695
  %v1769 = vpow.pop %v1768
  %v1770 = vmul.f32 %v1731, 1.442695
  %v1771 = vpow.pop %v1770
  %v1772 = vmul.f32 %v1732, 1.442695
  %v1773 = vpow.pop %v1772
  %v1774 = vmul.f32 %v1733, 1.442695
  %v1775 = vpow.pop %v1774
  %v1776 = vmul.f32 %v1734, 1.442695
  %v1777 = vpow.pop %v1776
  %v1778 = vmul.f32 %v1735, 1.442695
  %v1779 = vpow.pop %v1778
  %v1780 = vmul.f32 %v1736, 1.442695
  %v1781 = vpow.pop %v1780
  %v1782 = vmul.f32 %v1737, 1.442695
  %v1783 = vpow.pop %v1782
  %v1784 = vmul.f32 %v1738, 1.442695
  %v1785 = vpow.pop %v1784
  %v1786 = vmul.f32 %v1739, 1.442695
  %v1787 = vpow.pop %v1786
  %v1788 = vmul.f32 %v1740, 1.442695
  %v1789 = vpow.pop %v1788
  %v1790 = vmul.f32 %v1741, 1.442695
  %v1791 = vpow.pop %v1790
  %v1792 = vmul.f32 %v1742, 1.442695
  %v1793 = vpow.pop %v1792
  %v1794 = vmul.f32 %v1743, 1.442695
  %v1795 = vpow.pop %v1794
  %v1796 = vmul.f32 %v1744, 1.442695
  %v1797 = vpow.pop %v1796
  %v1798 = vmul.f32 %v1745, 1.442695
  %v1799 = vpow.pop %v1798
  %v1800 = vmul.f32 %v1746, 1.442695
  %v1801 = vpow.pop %v1800
  %v1802 = vmul.f32 %v1747, 1.442695
  %v1803 = vpow.pop %v1802
  %v1804 = vmul.f32 %v1748, 1.442695
  %v1805 = vpow.pop %v1804
  %v1806 = vmul.f32 %v1749, 1.442695
  %v1807 = vpow.pop %v1806
  %v1808 = vmul.f32 %v1750, 1.442695
  %v1809 = vpow.pop %v1808
  %v1810 = vmul.f32 %v1751, 1.442695
  %v1811 = vpow.pop %v1810
  %v1812 = vmul.f32 %v1752, 1.442695
  %v1813 = vpow.pop %v1812
  %v1814 = vmul.f32 %v1753, 1.442695
  %v1815 = vpow.pop %v1814
  %v1816 = vmul.f32 %v1754, 1.442695
  %v1817 = vpow.pop %v1816
  %v1818 = vmul.f32 %v1755, 1.442695
  %v1819 = vpow.pop %v1818
  %v1820 = vpack.c.bf16 %v1761, %v1757
  %v1821 = vpack.c.bf16 %v1763, %v1759
  %v1822 = vpack.c.bf16 %v1769, %v1765
  %v1823 = vpack.c.bf16 %v1771, %v1767
  %v1824 = vpack.c.bf16 %v1777, %v1773
  %v1825 = vpack.c.bf16 %v1779, %v1775
  %v1826 = vpack.c.bf16 %v1785, %v1781
  %v1827 = vpack.c.bf16 %v1787, %v1783
  %v1828 = vpack.c.bf16 %v1793, %v1789
  %v1829 = vpack.c.bf16 %v1795, %v1791
  %v1830 = vpack.c.bf16 %v1801, %v1797
  %v1831 = vpack.c.bf16 %v1803, %v1799
  %v1832 = vpack.c.bf16 %v1809, %v1805
  %v1833 = vpack.c.bf16 %v1811, %v1807
  %v1834 = vpack.c.bf16 %v1817, %v1813
  %v1835 = vpack.c.bf16 %v1819, %v1815
  %1836 = vmatprep.subr.bf16.mxu0 %v1821
  %1837 = vmatpush1.bf16.xpose.msra.mxu0 %v1820
  %1838 = vmatprep.subr.bf16.mxu0 %v1823
  %1839 = vmatpush1.bf16.xpose.msra.mxu0 %v1822
  %1840 = vmatprep.subr.bf16.mxu0 %v1825
  %1841 = vmatpush1.bf16.xpose.msra.mxu0 %v1824
  %1842 = vmatprep.subr.bf16.mxu0 %v1827
  %1843 = vmatpush1.bf16.xpose.msra.mxu0 %v1826
  %1844 = vmatprep.subr.bf16.mxu0 %v1829
  %1845 = vmatpush1.bf16.xpose.msra.mxu0 %v1828
  %1846 = vmatprep.subr.bf16.mxu0 %v1831
  %1847 = vmatpush1.bf16.xpose.msra.mxu0 %v1830
  %1848 = vmatprep.subr.bf16.mxu0 %v1833
  %1849 = vmatpush1.bf16.xpose.msra.mxu0 %v1832
  %1850 = vmatprep.subr.bf16.mxu0 %v1835
  %1851 = vmatpush1.bf16.xpose.msra.mxu0 %v1834
  %1852 = vmatprep.subr.bf16.mxu0 0
  %1853 = vmatpush1.bf16.xpose.msra.mxu0 0
  %1854 = vmatprep.subr.bf16.mxu0 0
  %1855 = vmatpush1.bf16.xpose.msra.mxu0 0
  %1856 = vmatprep.subr.bf16.mxu0 0
  %1857 = vmatpush1.bf16.xpose.msra.mxu0 0
  %1858 = vmatprep.subr.bf16.mxu0 0
  %1859 = vmatpush1.bf16.xpose.msra.mxu0 0
  %1860 = vmatprep.subr.bf16.mxu0 0
  %1861 = vmatpush1.bf16.xpose.msra.mxu0 0
  %1862 = vmatprep.subr.bf16.mxu0 0
  %1863 = vmatpush1.bf16.xpose.msra.mxu0 0
  %1864 = vmatprep.subr.bf16.mxu0 0
  %1865 = vmatpush1.bf16.xpose.msra.mxu0 0
  %1866 = vmatprep.subr.bf16.mxu0 0
  %1867 = vmatpush1.bf16.xpose.msra.mxu0 0
  %1868 = vmatprep.mubr.bf16.mxu0 %v1150
  %1869 = vmatmul.mubr.bf16.gmra.mrb[0].mxu0 %v1149
  %v1870 = vpop.f32.mrb[0].mxu0
  %v1871 = vadd.f32 0.0, %v1870
  %v1872 = vpop.f32.mrb[0].mxu0
  %v1873 = vpop.f32.mrb[0].mxu0
  %v1874 = vadd.f32 0.0, %v1873
  %v1875 = vpop.f32.mrb[0].mxu0
  %1876 = vdwg.mxu0
  %v1877 = vrcp.pop %v1874
  %v1878 = vmul.f32 1.0, %v1877
  %v1879 = vlaneseq
  %v1880 = vshrl.u32 %v1879, 7
  %v1881 = vsub.s32 0, %v1880
  %v1882 = vrot.slane %v1878, %v1881
  %v1883 = vmul.f32 %v1871, %v1882
  %v1884 = vadd.f32 %v1883, %v199
  %1885 = vst [vmem:[%s1520 + $0x8] sm:$0xff] %v1884
  // Predicated region
  $region10: #{attn_forward.1} parent=0 // pred_check
    _
  $region11: #{attn_forward.1} parent=0 // pred_check_branch
    %1887 = sbr.rel (0) target = $region13
  $region12: #{attn_forward.1} parent=0 // pred_region
    _
  $region13: #{attn_forward.1} parent=0 // pred_fallthru
    _
  // Predicated region
  $region14: #{attn_forward.1} parent=0 // pred_check
    _
  $region15: #{attn_forward.1} parent=0 // pred_check_branch
    %1889 = sbr.rel (0) target = $region17
  $region16: #{attn_forward.1} parent=0 // pred_region
    _
  $region17: #{attn_forward.1} parent=0 // pred_fallthru
    _

</llo_original>
